<compile_context>
chip_gen: v5e
topology: v5e:2x2
jax: 0.10.0
libtpu: 0.0.40
codegen_flags: <defaults>
</compile_context>

<pallas_src>
import jax
import jax.numpy as jnp
from jax.experimental import pallas as pl
from jax.experimental.pallas import tpu as pltpu

EPS = 1e-5
_INV_SQRT2 = 0.7071067811865476
_LANE = 128


def _round_up(n, m):
    return ((n + m - 1) // m) * m


def simba_kernel(x_ref, emb_w_ref, emb_b_ref,
                 w1_ref, b1_ref, w2_ref, b2_ref,
                 out_w_ref, out_b_ref, o_ref):
    # RSNorm (with frozen init running stats) is a constant scale that has been
    # pre-folded into emb_w / w1, so the kernel starts directly with the
    # embedding matmul. Dropout is identity in eval mode.
    x = x_ref[...].astype(jnp.bfloat16)                               # (TB, obs)
    feat = jnp.dot(x, emb_w_ref[...],
                   preferred_element_type=jnp.float32) + emb_b_ref[...]

    num_blocks = w1_ref.shape[0]
    for blk in range(num_blocks):                                     # static unroll
        h = jnp.dot(feat.astype(jnp.bfloat16), w1_ref[blk],
                    preferred_element_type=jnp.float32) + b1_ref[blk]
        # Exact GELU (matches nn.GELU(approximate='none')). Switch to
        # jax.nn.gelu(h, approximate=True) to move the transcendental to the
        # EUP if bit-exactness vs PyTorch is not required.
        h = 0.5 * h * (1.0 + jax.lax.erf(h * _INV_SQRT2))
        h = jnp.dot(h.astype(jnp.bfloat16), w2_ref[blk],
                    preferred_element_type=jnp.float32) + b2_ref[blk]
        feat = feat + h                                               # residual (f32)

    out = jnp.dot(feat.astype(jnp.bfloat16), out_w_ref[...],
                  preferred_element_type=jnp.float32) + out_b_ref[...]
    o_ref[...] = out.astype(o_ref.dtype)


@jax.jit
def simba_forward(x, params):
    emb_w, emb_b, w1, b1, w2, b2, out_w, out_b = params
    batch, obs_dim = x.shape
    num_blocks, hidden_dim, ff_dim = w1.shape
    action_dim = out_w.shape[-1]

    # ---- batch tiling: TB up to 256 fills the v6e/v7x MXU rows; tiny batches
    # fall back to the 8-aligned batch itself (single grid step).
    tb = min(256, _round_up(batch, 8))
    padded_batch = _round_up(batch, tb)
    if padded_batch != batch:
        x = jnp.pad(x, ((0, padded_batch - batch), (0, 0)))
    grid_n = pl.cdiv(padded_batch, tb)

    # ---- lane-dense output head: pad action_dim up to a multiple of 128 so the
    # output store is a full-lane (unmasked) vst; real columns sliced afterwards.
    out_pad = _round_up(action_dim, _LANE)
    if out_pad != action_dim:
        out_w = jnp.pad(out_w, ((0, 0), (0, out_pad - action_dim)))
        out_b = jnp.pad(out_b, ((0, 0), (0, out_pad - action_dim)))

    rep2 = lambda i: (0, 0)
    rep3 = lambda i: (0, 0, 0)
    in_specs = [
        pl.BlockSpec((tb, obs_dim), lambda i: (i, 0)),          # x: tiled over batch
        pl.BlockSpec((obs_dim, hidden_dim), rep2),              # emb_w (resident)
        pl.BlockSpec((1, hidden_dim), rep2),                    # emb_b
        # NOTE: FF weights are kept fully VMEM-resident (fine at these sizes in
        # bf16). For large configs (e.g. hidden_dim=1536, num_blocks=6) they no
        # longer fit — especially v7x's 64 MiB VMEM — and should be streamed
        # per block (grid axis over blocks marked "arbitrary" / pl.Buffered).
        pl.BlockSpec((num_blocks, hidden_dim, ff_dim), rep3),   # w1
        pl.BlockSpec((num_blocks, 1, ff_dim), rep3),            # b1
        pl.BlockSpec((num_blocks, ff_dim, hidden_dim), rep3),   # w2
        pl.BlockSpec((num_blocks, 1, hidden_dim), rep3),        # b2
        pl.BlockSpec((hidden_dim, out_pad), rep2),              # out_w
        pl.BlockSpec((1, out_pad), rep2),                       # out_b
    ]
    out_spec = pl.BlockSpec((tb, out_pad), lambda i: (i, 0))

    out = pl.pallas_call(
        simba_kernel,
        out_shape=jax.ShapeDtypeStruct((padded_batch, out_pad), jnp.float32),
        grid=(grid_n,),
        in_specs=in_specs,
        out_specs=out_spec,
        compiler_params=pltpu.CompilerParams(
            dimension_semantics=("parallel",),      # megacore sharding on v7x
            vmem_limit_bytes=64 * 1024 * 1024,      # raise scoped VMEM for big tiles
        ),
    )(x, emb_w, emb_b, w1, b1, w2, b2, out_w, out_b)

    return out[:batch, :action_dim]


def init_params(key, obs_dim, hidden_dim, num_blocks, action_dim):
    """Deterministic synthetic weights matching the nn.Linear shapes in SimBa
    ([in, out] layout).

    The constant RSNorm scale 1/sqrt(running_var + eps) (running stats at their
    initialization values: mean=0, var=1) is folded into emb_w and w1, and all
    matmul weights are stored in bfloat16 (accumulation stays f32 in-kernel).
    """
    k0, k1, k2, k3 = jax.random.split(key, 4)
    s = 0.02
    inv_std = 1.0 / float(jnp.sqrt(jnp.float32(1.0 + EPS)))

    emb_w = jax.random.normal(k0, (obs_dim, hidden_dim), jnp.float32) * s
    emb_b = jnp.zeros((1, hidden_dim), jnp.float32)
    w1 = jax.random.normal(k1, (num_blocks, hidden_dim, 4 * hidden_dim), jnp.float32) * s
    b1 = jnp.zeros((num_blocks, 1, 4 * hidden_dim), jnp.float32)
    w2 = jax.random.normal(k2, (num_blocks, 4 * hidden_dim, hidden_dim), jnp.float32) * s
    b2 = jnp.zeros((num_blocks, 1, hidden_dim), jnp.float32)
    out_w = jax.random.normal(k3, (hidden_dim, action_dim), jnp.float32) * s
    out_b = jnp.zeros((1, action_dim), jnp.float32)

    # Fold the (frozen) RSNorm scale into the weights; store weights as bf16.
    emb_w = (emb_w * inv_std).astype(jnp.bfloat16)
    w1 = (w1 * inv_std).astype(jnp.bfloat16)
    w2 = w2.astype(jnp.bfloat16)
    out_w = out_w.astype(jnp.bfloat16)
    return (emb_w, emb_b, w1, b1, w2, b2, out_w, out_b)


if __name__ == "__main__":
    # Small shapes consistent with the module: obs_shape=32, hidden_dim=128,
    # num_blocks=2, action_shape=8 (int branch of the output head), batch=8.
    batch, obs_dim, hidden_dim, num_blocks, action_dim = 8, 32, 128, 2, 8

    key = jax.random.PRNGKey(0)
    kx, kp = jax.random.split(key)
    x = jax.random.normal(kx, (batch, obs_dim), jnp.float32)
    params = init_params(kp, obs_dim, hidden_dim, num_blocks, action_dim)

    out = simba_forward(x, params)
    jax.block_until_ready(out)
    assert out.shape == (batch, action_dim)
    assert jnp.all(jnp.isfinite(out))
    print("KERNEL_OK")
</pallas_src>

<mosaic_0001>
module attributes {stable_mosaic.version = 11 : i64} {
  func.func @simba_kernel(%arg0: i32, %arg1: memref<8x32xf32, #tpu.memory_space<vmem>>, %arg2: memref<32x128xbf16, #tpu.memory_space<vmem>>, %arg3: memref<1x128xf32, #tpu.memory_space<vmem>>, %arg4: memref<2x128x512xbf16, #tpu.memory_space<vmem>>, %arg5: memref<2x1x512xf32, #tpu.memory_space<vmem>>, %arg6: memref<2x512x128xbf16, #tpu.memory_space<vmem>>, %arg7: memref<2x1x128xf32, #tpu.memory_space<vmem>>, %arg8: memref<128x128xbf16, #tpu.memory_space<vmem>>, %arg9: memref<1x128xf32, #tpu.memory_space<vmem>>, %arg10: memref<8x128xf32, #tpu.memory_space<vmem>>) attributes {dimension_semantics = [#tpu.dimension_semantics<parallel>], iteration_bounds = array<i64: 1>, scalar_prefetch = 0 : i64, scratch_operands = 0 : i64, tpu.core_type = #tpu.core_type<tc>, window_params = [{transform_indices = @transform_0, window_bounds = array<i64: 8, 32>}, {pipeline_mode = #tpu.pipeline_mode<synchronous>, transform_indices = @transform_1, window_bounds = array<i64: 32, 128>}, {pipeline_mode = #tpu.pipeline_mode<synchronous>, transform_indices = @transform_2, window_bounds = array<i64: 1, 128>}, {pipeline_mode = #tpu.pipeline_mode<synchronous>, transform_indices = @transform_3, window_bounds = array<i64: 2, 128, 512>}, {pipeline_mode = #tpu.pipeline_mode<synchronous>, transform_indices = @transform_4, window_bounds = array<i64: 2, 1, 512>}, {pipeline_mode = #tpu.pipeline_mode<synchronous>, transform_indices = @transform_5, window_bounds = array<i64: 2, 512, 128>}, {pipeline_mode = #tpu.pipeline_mode<synchronous>, transform_indices = @transform_6, window_bounds = array<i64: 2, 1, 128>}, {pipeline_mode = #tpu.pipeline_mode<synchronous>, transform_indices = @transform_7, window_bounds = array<i64: 128, 128>}, {pipeline_mode = #tpu.pipeline_mode<synchronous>, transform_indices = @transform_8, window_bounds = array<i64: 1, 128>}, {transform_indices = @transform_9, window_bounds = array<i64: 8, 128>}]} {
    %c0 = arith.constant 0 : index
    %c0_0 = arith.constant 0 : index
    %0 = vector.load %arg1[%c0, %c0_0] : memref<8x32xf32, #tpu.memory_space<vmem>>, vector<8x32xf32>
    %1 = arith.truncf %0 : vector<8x32xf32> to vector<8x32xbf16>
    %c0_1 = arith.constant 0 : index
    %c0_2 = arith.constant 0 : index
    %2 = vector.load %arg2[%c0_1, %c0_2] : memref<32x128xbf16, #tpu.memory_space<vmem>>, vector<32x128xbf16>
    %cst = arith.constant dense<0.000000e+00> : vector<8x128xf32>
    %3 = tpu.matmul %1, %2, %cst {dimension_numbers = #tpu.dot_dimension_numbers<[1], [0], [0], [1], [0, 0, 1, 1], [], []>} : vector<8x32xbf16>, vector<32x128xbf16>, vector<8x128xf32> -> vector<8x128xf32>
    %c0_3 = arith.constant 0 : index
    %c0_4 = arith.constant 0 : index
    %4 = vector.load %arg3[%c0_3, %c0_4] : memref<1x128xf32, #tpu.memory_space<vmem>>, vector<1x128xf32>
    %5 = vector.broadcast %4 : vector<1x128xf32> to vector<8x128xf32>
    %6 = arith.addf %3, %5 : vector<8x128xf32>
    %7 = arith.truncf %6 : vector<8x128xf32> to vector<8x128xbf16>
    %c0_5 = arith.constant 0 : index
    %c0_6 = arith.constant 0 : index
    %c0_7 = arith.constant 0 : index
    %8 = vector.load %arg4[%c0_5, %c0_6, %c0_7] : memref<2x128x512xbf16, #tpu.memory_space<vmem>>, vector<1x128x512xbf16>
    %9 = vector.shape_cast %8 : vector<1x128x512xbf16> to vector<128x512xbf16>
    %cst_8 = arith.constant dense<0.000000e+00> : vector<8x512xf32>
    %10 = tpu.matmul %7, %9, %cst_8 {dimension_numbers = #tpu.dot_dimension_numbers<[1], [0], [0], [1], [0, 0, 1, 1], [], []>} : vector<8x128xbf16>, vector<128x512xbf16>, vector<8x512xf32> -> vector<8x512xf32>
    %c0_9 = arith.constant 0 : index
    %c0_10 = arith.constant 0 : index
    %c0_11 = arith.constant 0 : index
    %11 = vector.load %arg5[%c0_9, %c0_10, %c0_11] : memref<2x1x512xf32, #tpu.memory_space<vmem>>, vector<1x1x512xf32>
    %12 = vector.shape_cast %11 : vector<1x1x512xf32> to vector<1x512xf32>
    %13 = vector.broadcast %12 : vector<1x512xf32> to vector<8x512xf32>
    %14 = arith.addf %10, %13 : vector<8x512xf32>
    %cst_12 = arith.constant 5.000000e-01 : f32
    %15 = vector.broadcast %cst_12 : f32 to vector<8x512xf32>
    %16 = arith.mulf %15, %14 : vector<8x512xf32>
    %cst_13 = arith.constant 0.707106769 : f32
    %17 = vector.broadcast %cst_13 : f32 to vector<8x512xf32>
    %18 = arith.mulf %14, %17 : vector<8x512xf32>
    %19 = math.erf %18 : vector<8x512xf32>
    %cst_14 = arith.constant 1.000000e+00 : f32
    %20 = vector.broadcast %cst_14 : f32 to vector<8x512xf32>
    %21 = arith.addf %20, %19 : vector<8x512xf32>
    %22 = arith.mulf %16, %21 : vector<8x512xf32>
    %23 = arith.truncf %22 : vector<8x512xf32> to vector<8x512xbf16>
    %c0_15 = arith.constant 0 : index
    %c0_16 = arith.constant 0 : index
    %c0_17 = arith.constant 0 : index
    %24 = vector.load %arg6[%c0_15, %c0_16, %c0_17] : memref<2x512x128xbf16, #tpu.memory_space<vmem>>, vector<1x512x128xbf16>
    %25 = vector.shape_cast %24 : vector<1x512x128xbf16> to vector<512x128xbf16>
    %cst_18 = arith.constant dense<0.000000e+00> : vector<8x128xf32>
    %26 = tpu.matmul %23, %25, %cst_18 {dimension_numbers = #tpu.dot_dimension_numbers<[1], [0], [0], [1], [0, 0, 1, 1], [], []>} : vector<8x512xbf16>, vector<512x128xbf16>, vector<8x128xf32> -> vector<8x128xf32>
    %c0_19 = arith.constant 0 : index
    %c0_20 = arith.constant 0 : index
    %c0_21 = arith.constant 0 : index
    %27 = vector.load %arg7[%c0_19, %c0_20, %c0_21] : memref<2x1x128xf32, #tpu.memory_space<vmem>>, vector<1x1x128xf32>
    %28 = vector.shape_cast %27 : vector<1x1x128xf32> to vector<1x128xf32>
    %29 = vector.broadcast %28 : vector<1x128xf32> to vector<8x128xf32>
    %30 = arith.addf %26, %29 : vector<8x128xf32>
    %31 = arith.addf %6, %30 : vector<8x128xf32>
    %32 = arith.truncf %31 : vector<8x128xf32> to vector<8x128xbf16>
    %c1 = arith.constant 1 : index
    %c0_22 = arith.constant 0 : index
    %c0_23 = arith.constant 0 : index
    %33 = vector.load %arg4[%c1, %c0_22, %c0_23] : memref<2x128x512xbf16, #tpu.memory_space<vmem>>, vector<1x128x512xbf16>
    %34 = vector.shape_cast %33 : vector<1x128x512xbf16> to vector<128x512xbf16>
    %cst_24 = arith.constant dense<0.000000e+00> : vector<8x512xf32>
    %35 = tpu.matmul %32, %34, %cst_24 {dimension_numbers = #tpu.dot_dimension_numbers<[1], [0], [0], [1], [0, 0, 1, 1], [], []>} : vector<8x128xbf16>, vector<128x512xbf16>, vector<8x512xf32> -> vector<8x512xf32>
    %c1_25 = arith.constant 1 : index
    %c0_26 = arith.constant 0 : index
    %c0_27 = arith.constant 0 : index
    %36 = vector.load %arg5[%c1_25, %c0_26, %c0_27] : memref<2x1x512xf32, #tpu.memory_space<vmem>>, vector<1x1x512xf32>
    %37 = vector.shape_cast %36 : vector<1x1x512xf32> to vector<1x512xf32>
    %38 = vector.broadcast %37 : vector<1x512xf32> to vector<8x512xf32>
    %39 = arith.addf %35, %38 : vector<8x512xf32>
    %cst_28 = arith.constant 5.000000e-01 : f32
    %40 = vector.broadcast %cst_28 : f32 to vector<8x512xf32>
    %41 = arith.mulf %40, %39 : vector<8x512xf32>
    %cst_29 = arith.constant 0.707106769 : f32
    %42 = vector.broadcast %cst_29 : f32 to vector<8x512xf32>
    %43 = arith.mulf %39, %42 : vector<8x512xf32>
    %44 = math.erf %43 : vector<8x512xf32>
    %cst_30 = arith.constant 1.000000e+00 : f32
    %45 = vector.broadcast %cst_30 : f32 to vector<8x512xf32>
    %46 = arith.addf %45, %44 : vector<8x512xf32>
    %47 = arith.mulf %41, %46 : vector<8x512xf32>
    %48 = arith.truncf %47 : vector<8x512xf32> to vector<8x512xbf16>
    %c1_31 = arith.constant 1 : index
    %c0_32 = arith.constant 0 : index
    %c0_33 = arith.constant 0 : index
    %49 = vector.load %arg6[%c1_31, %c0_32, %c0_33] : memref<2x512x128xbf16, #tpu.memory_space<vmem>>, vector<1x512x128xbf16>
    %50 = vector.shape_cast %49 : vector<1x512x128xbf16> to vector<512x128xbf16>
    %cst_34 = arith.constant dense<0.000000e+00> : vector<8x128xf32>
    %51 = tpu.matmul %48, %50, %cst_34 {dimension_numbers = #tpu.dot_dimension_numbers<[1], [0], [0], [1], [0, 0, 1, 1], [], []>} : vector<8x512xbf16>, vector<512x128xbf16>, vector<8x128xf32> -> vector<8x128xf32>
    %c1_35 = arith.constant 1 : index
    %c0_36 = arith.constant 0 : index
    %c0_37 = arith.constant 0 : index
    %52 = vector.load %arg7[%c1_35, %c0_36, %c0_37] : memref<2x1x128xf32, #tpu.memory_space<vmem>>, vector<1x1x128xf32>
    %53 = vector.shape_cast %52 : vector<1x1x128xf32> to vector<1x128xf32>
    %54 = vector.broadcast %53 : vector<1x128xf32> to vector<8x128xf32>
    %55 = arith.addf %51, %54 : vector<8x128xf32>
    %56 = arith.addf %31, %55 : vector<8x128xf32>
    %57 = arith.truncf %56 : vector<8x128xf32> to vector<8x128xbf16>
    %c0_38 = arith.constant 0 : index
    %c0_39 = arith.constant 0 : index
    %58 = vector.load %arg8[%c0_38, %c0_39] : memref<128x128xbf16, #tpu.memory_space<vmem>>, vector<128x128xbf16>
    %cst_40 = arith.constant dense<0.000000e+00> : vector<8x128xf32>
    %59 = tpu.matmul %57, %58, %cst_40 {dimension_numbers = #tpu.dot_dimension_numbers<[1], [0], [0], [1], [0, 0, 1, 1], [], []>} : vector<8x128xbf16>, vector<128x128xbf16>, vector<8x128xf32> -> vector<8x128xf32>
    %c0_41 = arith.constant 0 : index
    %c0_42 = arith.constant 0 : index
    %60 = vector.load %arg9[%c0_41, %c0_42] : memref<1x128xf32, #tpu.memory_space<vmem>>, vector<1x128xf32>
    %61 = vector.broadcast %60 : vector<1x128xf32> to vector<8x128xf32>
    %62 = arith.addf %59, %61 : vector<8x128xf32>
    %c0_43 = arith.constant 0 : index
    %c0_44 = arith.constant 0 : index
    %63 = vector.load %arg10[%c0_43, %c0_44] : memref<8x128xf32, #tpu.memory_space<vmem>>, vector<8x128xf32>
    tpu.vector_store %arg10[%c0_43, %c0_44], %62 {strides = array<i32>} : memref<8x128xf32, #tpu.memory_space<vmem>>, vector<8x128xf32>,
    return
  }
  func.func @transform_0(%arg0: i32) -> (i32, i32) {
    %c0_i32 = arith.constant 0 : i32
    %c0_i32_0 = arith.constant 0 : i32
    return %arg0, %c0_i32 : i32, i32
  }
  func.func @transform_1(%arg0: i32) -> (i32, i32) {
    %c0_i32 = arith.constant 0 : i32
    %c0_i32_0 = arith.constant 0 : i32
    %c0_i32_1 = arith.constant 0 : i32
    return %c0_i32, %c0_i32_0 : i32, i32
  }
  func.func @transform_2(%arg0: i32) -> (i32, i32) {
    %c0_i32 = arith.constant 0 : i32
    %c0_i32_0 = arith.constant 0 : i32
    %c0_i32_1 = arith.constant 0 : i32
    return %c0_i32, %c0_i32_0 : i32, i32
  }
  func.func @transform_3(%arg0: i32) -> (i32, i32, i32) {
    %c0_i32 = arith.constant 0 : i32
    %c0_i32_0 = arith.constant 0 : i32
    %c0_i32_1 = arith.constant 0 : i32
    %c0_i32_2 = arith.constant 0 : i32
    return %c0_i32, %c0_i32_0, %c0_i32_1 : i32, i32, i32
  }
  func.func @transform_4(%arg0: i32) -> (i32, i32, i32) {
    %c0_i32 = arith.constant 0 : i32
    %c0_i32_0 = arith.constant 0 : i32
    %c0_i32_1 = arith.constant 0 : i32
    %c0_i32_2 = arith.constant 0 : i32
    return %c0_i32, %c0_i32_0, %c0_i32_1 : i32, i32, i32
  }
  func.func @transform_5(%arg0: i32) -> (i32, i32, i32) {
    %c0_i32 = arith.constant 0 : i32
    %c0_i32_0 = arith.constant 0 : i32
    %c0_i32_1 = arith.constant 0 : i32
    %c0_i32_2 = arith.constant 0 : i32
    return %c0_i32, %c0_i32_0, %c0_i32_1 : i32, i32, i32
  }
  func.func @transform_6(%arg0: i32) -> (i32, i32, i32) {
    %c0_i32 = arith.constant 0 : i32
    %c0_i32_0 = arith.constant 0 : i32
    %c0_i32_1 = arith.constant 0 : i32
    %c0_i32_2 = arith.constant 0 : i32
    return %c0_i32, %c0_i32_0, %c0_i32_1 : i32, i32, i32
  }
  func.func @transform_7(%arg0: i32) -> (i32, i32) {
    %c0_i32 = arith.constant 0 : i32
    %c0_i32_0 = arith.constant 0 : i32
    %c0_i32_1 = arith.constant 0 : i32
    return %c0_i32, %c0_i32_0 : i32, i32
  }
  func.func @transform_8(%arg0: i32) -> (i32, i32) {
    %c0_i32 = arith.constant 0 : i32
    %c0_i32_0 = arith.constant 0 : i32
    %c0_i32_1 = arith.constant 0 : i32
    return %c0_i32, %c0_i32_0 : i32, i32
  }
  func.func @transform_9(%arg0: i32) -> (i32, i32) {
    %c0_i32 = arith.constant 0 : i32
    %c0_i32_0 = arith.constant 0 : i32
    return %arg0, %c0_i32 : i32, i32
  }
}

</mosaic_0001>

<llo_original>
// kernel: simba_forward.1
$region0: #{simba_forward.1}
  #allocation0 [shape = 'u32[]', space=smem, size = 0x4, offset = 0x4, fixed_abs, tag = 'smem constant byte address 0x4 - core index']
  #allocation1 [shape = 'u32[72,128]{1,0:T(1,128)}', space=vmem, size = 0x9000, scoped, tag = 'internal scratch']
  %s0 = inlined_call_operand.vmem [shape: f32[8,32], index: 0, kind: input, shape index: {}]
  %s1 = inlined_call_operand.vmem [shape: bf16[32,128], index: 1, kind: input, shape index: {}]
  %s2 = inlined_call_operand.vmem [shape: f32[1,128], index: 2, kind: input, shape index: {}]
  %s3 = inlined_call_operand.hbm [shape: bf16[2,128,512], index: 3, kind: input, shape index: {}]
  %s4 = inlined_call_operand.vmem [shape: f32[2,1,512], index: 4, kind: input, shape index: {}]
  %s5 = inlined_call_operand.hbm [shape: bf16[2,512,128], index: 5, kind: input, shape index: {}]
  %s6 = inlined_call_operand.vmem [shape: f32[2,1,128], index: 6, kind: input, shape index: {}]
  %s7 = inlined_call_operand.vmem [shape: bf16[128,128], index: 7, kind: input, shape index: {}]
  %s8 = inlined_call_operand.vmem [shape: f32[1,128], index: 8, kind: input, shape index: {}]
  %s9 = inlined_call_operand.hbm [shape: f32[8,128], index: 9, kind: output, shape index: {}]
  %s10 = sld [smem:[#allocation0]]
  $region54: #{simba_forward.1} parent=0
    _
  %s12 = ssub.s32 1, %s10
  %s13 = scalar_select 0, %s12, %s10
  $region1: #{simba_forward.1} parent=0
    #allocation2 [shape = 'u8[262144]{0}', space=vmem, size = 0x40000, scoped, tag = 'input window, operand 3, single buffered']
    #allocation3 [shape = 's32[1]{0}', space=sflag, size = 0x4, scoped, tag = 'scoped memory for simba_forward.1']
    #allocation4 [shape = 's32[1]{0}', space=sflag, size = 0x4, scoped, tag = 'scoped memory for simba_forward.1']
    #allocation5 [shape = 'u8[262144]{0}', space=vmem, size = 0x40000, scoped, tag = 'input window, operand 5, single buffered']
    #allocation6 [shape = 's32[1]{0}', space=sflag, size = 0x4, scoped, tag = 'scoped memory for simba_forward.1']
    #allocation7 [shape = 'u8[4096]{0}', space=vmem, size = 0x1000, scoped, tag = 'output window, operand 0, single buffered']
    %14 = vsyncpa [#allocation3], 0
    %15 = vsyncpa [#allocation6], 0
    %16 = vsyncpa [#allocation4], 0
    // Predicated region
    $region2: #{simba_forward.1} parent=1 // pred_check
      _
    $region3: #{simba_forward.1} parent=1 // pred_check_branch
      %18 = sbr.rel (0) target = $region5
    $region4: #{simba_forward.1} parent=1 // pred_region
      _
    $region5: #{simba_forward.1} parent=1 // pred_fallthru
      _
    // Predicated region
    $region6: #{simba_forward.1} parent=1 // pred_check
      _
    $region7: #{simba_forward.1} parent=1 // pred_check_branch
      %20 = sbr.rel (0) target = $region9
    $region8: #{simba_forward.1} parent=1 // pred_region
      _
    $region9: #{simba_forward.1} parent=1 // pred_fallthru
      _
    // Predicated region
    $region10: #{simba_forward.1} parent=1 // pred_check
      _
    $region11: #{simba_forward.1} parent=1 // pred_check_branch
      %22 = sbr.rel (0) target = $region13
    $region12: #{simba_forward.1} parent=1 // pred_region
      _
    $region13: #{simba_forward.1} parent=1 // pred_fallthru
      _
    // Predicated region
    $region14: #{simba_forward.1} parent=1 // pred_check
      _
    $region15: #{simba_forward.1} parent=1 // pred_check_branch
      %24 = sbr.rel (0) target = $region17
    $region16: #{simba_forward.1} parent=1 // pred_region
      %26 = vsyncadd [#allocation3], 0
      %s27 = sshll.u32 %s3, 4
      %s28 = int_to_ptr.hbm [resolvable:$true] %s27
      %s29 = sshll.u32 [#allocation2], 4
      %s30 = int_to_ptr.vmem [resolvable:$true] %s29
      %35 = dma.hbm_to_vmem [thread:$0]  %s28, 8192, %s30, [#allocation3], 256, 256, 16
    $region17: #{simba_forward.1} parent=1 // pred_fallthru
      _
    // Predicated region
    $region18: #{simba_forward.1} parent=1 // pred_check
      _
    $region19: #{simba_forward.1} parent=1 // pred_check_branch
      %37 = sbr.rel (0) target = $region21
    $region20: #{simba_forward.1} parent=1 // pred_region
      _
    $region21: #{simba_forward.1} parent=1 // pred_fallthru
      _
    // Predicated region
    $region22: #{simba_forward.1} parent=1 // pred_check
      _
    $region23: #{simba_forward.1} parent=1 // pred_check_branch
      %39 = sbr.rel (0) target = $region25
    $region24: #{simba_forward.1} parent=1 // pred_region
      %41 = vsyncadd [#allocation6], 0
      %s42 = sshll.u32 %s5, 4
      %s43 = int_to_ptr.hbm [resolvable:$true] %s42
      %s44 = sshll.u32 [#allocation5], 4
      %s45 = int_to_ptr.vmem [resolvable:$true] %s44
      %50 = dma.hbm_to_vmem [thread:$0]  %s43, 8192, %s45, [#allocation6], 64, 64, 4
    $region25: #{simba_forward.1} parent=1 // pred_fallthru
      _
    // Predicated region
    $region26: #{simba_forward.1} parent=1 // pred_check
      _
    $region27: #{simba_forward.1} parent=1 // pred_check_branch
      %52 = sbr.rel (0) target = $region29
    $region28: #{simba_forward.1} parent=1 // pred_region
      _
    $region29: #{simba_forward.1} parent=1 // pred_fallthru
      _
    // Predicated region
    $region30: #{simba_forward.1} parent=1 // pred_check
      _
    $region31: #{simba_forward.1} parent=1 // pred_check_branch
      %54 = sbr.rel (0) target = $region33
    $region32: #{simba_forward.1} parent=1 // pred_region
      _
    $region33: #{simba_forward.1} parent=1 // pred_fallthru
      _
    // Predicated region
    $region34: #{simba_forward.1} parent=1 // pred_check
      _
    $region35: #{simba_forward.1} parent=1 // pred_check_branch
      %56 = sbr.rel (0) target = $region37
    $region36: #{simba_forward.1} parent=1 // pred_region
      _
    $region37: #{simba_forward.1} parent=1 // pred_fallthru
      _
    // Predicated region
    $region38: #{simba_forward.1} parent=1 // pred_check
      _
    $region39: #{simba_forward.1} parent=1 // pred_check_branch
      %58 = sbr.rel (0) target = $region41
    $region40: #{simba_forward.1} parent=1 // pred_region
      %60 = dma.done [#allocation3], 8192
    $region41: #{simba_forward.1} parent=1 // pred_fallthru
      _
    // Predicated region
    $region42: #{simba_forward.1} parent=1 // pred_check
      _
    $region43: #{simba_forward.1} parent=1 // pred_check_branch
      %62 = sbr.rel (0) target = $region45
    $region44: #{simba_forward.1} parent=1 // pred_region
      %64 = dma.done [#allocation6], 8192
    $region45: #{simba_forward.1} parent=1 // pred_fallthru
      _
    %v66 = vld [vmem:[%s0] sm:$0xff]
    %v67 = vpack.c.bf16 %v66, %v66
    %v68 = vld [vmem:[%s1] sm:$0xf]
    %v69 = vld [vmem:[%s1 + $0x4] sm:$0xf]
    %v70 = vld [vmem:[%s1 + $0x8] sm:$0xf]
    %v71 = vld [vmem:[%s1 + $0xc] sm:$0xf]
    %v72 = vld [vmem:[%s2] sm:$0x1]
    %v74 = vperm.slane %v72, 0
    %v80 = vunpack.c.l.b16 %v68
    %v81 = vunpack.c.l.b16 %v69
    %v82 = vunpack.c.l.b16 %v70
    %v83 = vunpack.c.l.b16 %v71
    %v84 = vpack.c.b16 %v81, %v80
    %v85 = vpack.c.b16 %v83, %v82
    %vm88 = vcmask 261120
    %v90 = vsel %vm88, %v67, 0
    %92 = vmatpush.bf16.msra.mxu0 0
    %93 = vmatpush.bf16.msra.mxu0 0
    %94 = vmatpush.bf16.msra.mxu0 0
    %95 = vmatpush.bf16.msra.mxu0 0
    %96 = vmatpush.bf16.msra.mxu0 0
    %97 = vmatpush.bf16.msra.mxu0 0
    %98 = vmatpush.bf16.msra.mxu0 %v85
    %99 = vmatpush.bf16.msra.mxu0 %v84
    %100 = vmatmul.bf16.gmra.mxu0 %v90
    %v101 = vpop.f32.mrf.mxu0
    %v102 = vadd.f32 %v74, %v101
    %v103 = vpop.f32.mrf.mxu0
    %104 = vdwg.mxu0
    %v105 = vpack.c.bf16 %v102, %v102
    %v106 = vld [vmem:[#allocation2] sm:$0xff]
    %v107 = vld [vmem:[#allocation2 + $0x8] sm:$0xff]
    %v108 = vld [vmem:[#allocation2 + $0x10] sm:$0xff]
    %v109 = vld [vmem:[#allocation2 + $0x18] sm:$0xff]
    %v110 = vld [vmem:[#allocation2 + $0x20] sm:$0xff]
    %v111 = vld [vmem:[#allocation2 + $0x28] sm:$0xff]
    %v112 = vld [vmem:[#allocation2 + $0x30] sm:$0xff]
    %v113 = vld [vmem:[#allocation2 + $0x38] sm:$0xff]
    %v114 = vld [vmem:[#allocation2 + $0x40] sm:$0xff]
    %v115 = vld [vmem:[#allocation2 + $0x48] sm:$0xff]
    %v116 = vld [vmem:[#allocation2 + $0x50] sm:$0xff]
    %v117 = vld [vmem:[#allocation2 + $0x58] sm:$0xff]
    %v118 = vld [vmem:[#allocation2 + $0x60] sm:$0xff]
    %v119 = vld [vmem:[#allocation2 + $0x68] sm:$0xff]
    %v120 = vld [vmem:[#allocation2 + $0x70] sm:$0xff]
    %v121 = vld [vmem:[#allocation2 + $0x78] sm:$0xff]
    %v122 = vld [vmem:[#allocation2 + $0x80] sm:$0xff]
    %v123 = vld [vmem:[#allocation2 + $0x88] sm:$0xff]
    %v124 = vld [vmem:[#allocation2 + $0x90] sm:$0xff]
    %v125 = vld [vmem:[#allocation2 + $0x98] sm:$0xff]
    %v126 = vld [vmem:[#allocation2 + $0xa0] sm:$0xff]
    %v127 = vld [vmem:[#allocation2 + $0xa8] sm:$0xff]
    %v128 = vld [vmem:[#allocation2 + $0xb0] sm:$0xff]
    %v129 = vld [vmem:[#allocation2 + $0xb8] sm:$0xff]
    %v130 = vld [vmem:[#allocation2 + $0xc0] sm:$0xff]
    %v131 = vld [vmem:[#allocation2 + $0xc8] sm:$0xff]
    %v132 = vld [vmem:[#allocation2 + $0xd0] sm:$0xff]
    %v133 = vld [vmem:[#allocation2 + $0xd8] sm:$0xff]
    %v134 = vld [vmem:[#allocation2 + $0xe0] sm:$0xff]
    %v135 = vld [vmem:[#allocation2 + $0xe8] sm:$0xff]
    %v136 = vld [vmem:[#allocation2 + $0xf0] sm:$0xff]
    %v137 = vld [vmem:[#allocation2 + $0xf8] sm:$0xff]
    %v138 = vld [vmem:[%s4] sm:$0xf]
    %v140 = vperm.slane %v138, 0
    %v141 = vperm.slane %v138, 1
    %v142 = vperm.slane %v138, 2
    %v143 = vperm.slane %v138, 3
    %v180 = vunpack.c.l.b16 %v106
    %v181 = vunpack.c.h.b16 %v106
    %v182 = vunpack.c.l.b16 %v107
    %v183 = vunpack.c.h.b16 %v107
    %v184 = vunpack.c.l.b16 %v108
    %v185 = vunpack.c.h.b16 %v108
    %v186 = vunpack.c.l.b16 %v109
    %v187 = vunpack.c.h.b16 %v109
    %v188 = vunpack.c.l.b16 %v110
    %v189 = vunpack.c.h.b16 %v110
    %v190 = vunpack.c.l.b16 %v111
    %v191 = vunpack.c.h.b16 %v111
    %v192 = vunpack.c.l.b16 %v112
    %v193 = vunpack.c.h.b16 %v112
    %v194 = vunpack.c.l.b16 %v113
    %v195 = vunpack.c.h.b16 %v113
    %v196 = vunpack.c.l.b16 %v114
    %v197 = vunpack.c.h.b16 %v114
    %v198 = vunpack.c.l.b16 %v115
    %v199 = vunpack.c.h.b16 %v115
    %v200 = vunpack.c.l.b16 %v116
    %v201 = vunpack.c.h.b16 %v116
    %v202 = vunpack.c.l.b16 %v117
    %v203 = vunpack.c.h.b16 %v117
    %v204 = vunpack.c.l.b16 %v118
    %v205 = vunpack.c.h.b16 %v118
    %v206 = vunpack.c.l.b16 %v119
    %v207 = vunpack.c.h.b16 %v119
    %v208 = vunpack.c.l.b16 %v120
    %v209 = vunpack.c.h.b16 %v120
    %v210 = vunpack.c.l.b16 %v121
    %v211 = vunpack.c.h.b16 %v121
    %v212 = vunpack.c.l.b16 %v122
    %v213 = vunpack.c.h.b16 %v122
    %v214 = vunpack.c.l.b16 %v123
    %v215 = vunpack.c.h.b16 %v123
    %v216 = vunpack.c.l.b16 %v124
    %v217 = vunpack.c.h.b16 %v124
    %v218 = vunpack.c.l.b16 %v125
    %v219 = vunpack.c.h.b16 %v125
    %v220 = vunpack.c.l.b16 %v126
    %v221 = vunpack.c.h.b16 %v126
    %v222 = vunpack.c.l.b16 %v127
    %v223 = vunpack.c.h.b16 %v127
    %v224 = vunpack.c.l.b16 %v128
    %v225 = vunpack.c.h.b16 %v128
    %v226 = vunpack.c.l.b16 %v129
    %v227 = vunpack.c.h.b16 %v129
    %v228 = vunpack.c.l.b16 %v130
    %v229 = vunpack.c.h.b16 %v130
    %v230 = vunpack.c.l.b16 %v131
    %v231 = vunpack.c.h.b16 %v131
    %v232 = vunpack.c.l.b16 %v132
    %v233 = vunpack.c.h.b16 %v132
    %v234 = vunpack.c.l.b16 %v133
    %v235 = vunpack.c.h.b16 %v133
    %v236 = vunpack.c.l.b16 %v134
    %v237 = vunpack.c.h.b16 %v134
    %v238 = vunpack.c.l.b16 %v135
    %v239 = vunpack.c.h.b16 %v135
    %v240 = vunpack.c.l.b16 %v136
    %v241 = vunpack.c.h.b16 %v136
    %v242 = vunpack.c.l.b16 %v137
    %v243 = vunpack.c.h.b16 %v137
    %v244 = vpack.c.b16 %v184, %v180
    %v245 = vpack.c.b16 %v185, %v181
    %v246 = vpack.c.b16 %v186, %v182
    %v247 = vpack.c.b16 %v187, %v183
    %v248 = vpack.c.b16 %v192, %v188
    %v249 = vpack.c.b16 %v193, %v189
    %v250 = vpack.c.b16 %v194, %v190
    %v251 = vpack.c.b16 %v195, %v191
    %v252 = vpack.c.b16 %v200, %v196
    %v253 = vpack.c.b16 %v201, %v197
    %v254 = vpack.c.b16 %v202, %v198
    %v255 = vpack.c.b16 %v203, %v199
    %v256 = vpack.c.b16 %v208, %v204
    %v257 = vpack.c.b16 %v209, %v205
    %v258 = vpack.c.b16 %v210, %v206
    %v259 = vpack.c.b16 %v211, %v207
    %v260 = vpack.c.b16 %v216, %v212
    %v261 = vpack.c.b16 %v217, %v213
    %v262 = vpack.c.b16 %v218, %v214
    %v263 = vpack.c.b16 %v219, %v215
    %v264 = vpack.c.b16 %v224, %v220
    %v265 = vpack.c.b16 %v225, %v221
    %v266 = vpack.c.b16 %v226, %v222
    %v267 = vpack.c.b16 %v227, %v223
    %v268 = vpack.c.b16 %v232, %v228
    %v269 = vpack.c.b16 %v233, %v229
    %v270 = vpack.c.b16 %v234, %v230
    %v271 = vpack.c.b16 %v235, %v231
    %v272 = vpack.c.b16 %v240, %v236
    %v273 = vpack.c.b16 %v241, %v237
    %v274 = vpack.c.b16 %v242, %v238
    %v275 = vpack.c.b16 %v243, %v239
    %308 = vmatpush.bf16.msra.mxu0 %v272
    %309 = vmatpush.bf16.msra.mxu0 %v268
    %310 = vmatpush.bf16.msra.mxu0 %v264
    %311 = vmatpush.bf16.msra.mxu0 %v260
    %312 = vmatpush.bf16.msra.mxu0 %v256
    %313 = vmatpush.bf16.msra.mxu0 %v252
    %314 = vmatpush.bf16.msra.mxu0 %v248
    %315 = vmatpush.bf16.msra.mxu0 %v244
    %316 = vmatmul.bf16.gmra.mxu0 %v105
    %v317 = vpop.f32.mrf.mxu0
    %v318 = vadd.f32 %v140, %v317
    %v319 = vpop.f32.mrf.mxu0
    %320 = vdwg.mxu0
    %321 = vmatpush.bf16.msra.mxu0 %v273
    %322 = vmatpush.bf16.msra.mxu0 %v269
    %323 = vmatpush.bf16.msra.mxu0 %v265
    %324 = vmatpush.bf16.msra.mxu0 %v261
    %325 = vmatpush.bf16.msra.mxu0 %v257
    %326 = vmatpush.bf16.msra.mxu0 %v253
    %327 = vmatpush.bf16.msra.mxu0 %v249
    %328 = vmatpush.bf16.msra.mxu0 %v245
    %329 = vmatmul.bf16.gmra.mxu0 %v105
    %v330 = vpop.f32.mrf.mxu0
    %v331 = vadd.f32 %v141, %v330
    %v332 = vpop.f32.mrf.mxu0
    %333 = vdwg.mxu0
    %334 = vmatpush.bf16.msra.mxu0 %v274
    %335 = vmatpush.bf16.msra.mxu0 %v270
    %336 = vmatpush.bf16.msra.mxu0 %v266
    %337 = vmatpush.bf16.msra.mxu0 %v262
    %338 = vmatpush.bf16.msra.mxu0 %v258
    %339 = vmatpush.bf16.msra.mxu0 %v254
    %340 = vmatpush.bf16.msra.mxu0 %v250
    %341 = vmatpush.bf16.msra.mxu0 %v246
    %342 = vmatmul.bf16.gmra.mxu0 %v105
    %v343 = vpop.f32.mrf.mxu0
    %v344 = vadd.f32 %v142, %v343
    %v345 = vpop.f32.mrf.mxu0
    %346 = vdwg.mxu0
    %347 = vmatpush.bf16.msra.mxu0 %v275
    %348 = vmatpush.bf16.msra.mxu0 %v271
    %349 = vmatpush.bf16.msra.mxu0 %v267
    %350 = vmatpush.bf16.msra.mxu0 %v263
    %351 = vmatpush.bf16.msra.mxu0 %v259
    %352 = vmatpush.bf16.msra.mxu0 %v255
    %353 = vmatpush.bf16.msra.mxu0 %v251
    %354 = vmatpush.bf16.msra.mxu0 %v247
    %355 = vmatmul.bf16.gmra.mxu0 %v105
    %v356 = vpop.f32.mrf.mxu0
    %v357 = vadd.f32 %v143, %v356
    %v358 = vpop.f32.mrf.mxu0
    %359 = vdwg.mxu0
    %v360 = vmul.f32 %v318, 0.5
    %v361 = vmul.f32 %v331, 0.5
    %v362 = vmul.f32 %v344, 0.5
    %v363 = vmul.f32 %v357, 0.5
    %v364 = vmul.f32 %v318, 0.70710677
    %v365 = vmul.f32 %v331, 0.70710677
    %v366 = vmul.f32 %v344, 0.70710677
    %v367 = vmul.f32 %v357, 0.70710677
    %v368 = vmul.f32 %v364, %v364
    %v369 = vmin.f32 16.0, %v368
    %v370 = vmul.f32 %v369, 2.1237322e-06
    %v371 = vadd.f32 %v370, 0.00028619796
    %v372 = vmul.f32 %v369, %v371
    %v373 = vadd.f32 %v372, 0.0036580483
    %v374 = vmul.f32 %v369, %v373
    %v375 = vadd.f32 %v374, 0.05243302
    %v376 = vmul.f32 %v369, %v375
    %v377 = vadd.f32 %v376, 0.18741608
    %v378 = vmul.f32 %v369, %v377
    %v379 = vadd.f32 %v378, 1.1283791
    %v380 = vmul.f32 %v364, %v379
    %v381 = vmul.f32 %v369, 3.8918573e-05
    %v382 = vadd.f32 %v381, 0.001143296
    %v383 = vmul.f32 %v369, %v382
    %v384 = vadd.f32 %v383, 0.014752088
    %v385 = vmul.f32 %v369, %v384
    %v386 = vadd.f32 %v385, 0.112945676
    %v387 = vmul.f32 %v369, %v386
    %v388 = vadd.f32 %v387, 0.4994258
    %v389 = vmul.f32 %v369, %v388
    %v390 = vadd.f32 %v389, 1.0
    %v391 = vrcp.pop %v390
    %v392 = vmul.f32 %v390, %v391
    %v393 = vsub.f32 1.0, %v392
    %v394 = vmul.f32 %v391, %v393
    %v395 = vadd.f32 %v391, %v394
    %vm396 = vweird.f32 %v390
    %vm397 = vweird.f32 %v391
    %vm398 = vmor %vm396, %vm397
    %v399 = vsel %vm398, %v391, %v395
    %v400 = vand.u32 2147483647, %v390
    %vm401 = vcmp.eq.f32.partialorder %v400, 8.507059e+37
    %v402 = vand.u32 %v390, 2147483648
    %v403 = vor.u32 1.1754944e-38, %v402
    %v404 = vsel %vm401, %v403, %v399
    %v405 = vmul.f32 %v380, %v404
    %v406 = vmin.f32 %v405, 1.0
    %v407 = vmax.f32 %v406, -1.0
    %v408 = vmul.f32 %v365, %v365
    %v409 = vmin.f32 16.0, %v408
    %v410 = vmul.f32 %v409, 2.1237322e-06
    %v411 = vadd.f32 %v410, 0.00028619796
    %v412 = vmul.f32 %v409, %v411
    %v413 = vadd.f32 %v412, 0.0036580483
    %v414 = vmul.f32 %v409, %v413
    %v415 = vadd.f32 %v414, 0.05243302
    %v416 = vmul.f32 %v409, %v415
    %v417 = vadd.f32 %v416, 0.18741608
    %v418 = vmul.f32 %v409, %v417
    %v419 = vadd.f32 %v418, 1.1283791
    %v420 = vmul.f32 %v365, %v419
    %v421 = vmul.f32 %v409, 3.8918573e-05
    %v422 = vadd.f32 %v421, 0.001143296
    %v423 = vmul.f32 %v409, %v422
    %v424 = vadd.f32 %v423, 0.014752088
    %v425 = vmul.f32 %v409, %v424
    %v426 = vadd.f32 %v425, 0.112945676
    %v427 = vmul.f32 %v409, %v426
    %v428 = vadd.f32 %v427, 0.4994258
    %v429 = vmul.f32 %v409, %v428
    %v430 = vadd.f32 %v429, 1.0
    %v431 = vrcp.pop %v430
    %v432 = vmul.f32 %v430, %v431
    %v433 = vsub.f32 1.0, %v432
    %v434 = vmul.f32 %v431, %v433
    %v435 = vadd.f32 %v431, %v434
    %vm436 = vweird.f32 %v430
    %vm437 = vweird.f32 %v431
    %vm438 = vmor %vm436, %vm437
    %v439 = vsel %vm438, %v431, %v435
    %v440 = vand.u32 2147483647, %v430
    %vm441 = vcmp.eq.f32.partialorder %v440, 8.507059e+37
    %v442 = vand.u32 %v430, 2147483648
    %v443 = vor.u32 1.1754944e-38, %v442
    %v444 = vsel %vm441, %v443, %v439
    %v445 = vmul.f32 %v420, %v444
    %v446 = vmin.f32 %v445, 1.0
    %v447 = vmax.f32 %v446, -1.0
    %v448 = vmul.f32 %v366, %v366
    %v449 = vmin.f32 16.0, %v448
    %v450 = vmul.f32 %v449, 2.1237322e-06
    %v451 = vadd.f32 %v450, 0.00028619796
    %v452 = vmul.f32 %v449, %v451
    %v453 = vadd.f32 %v452, 0.0036580483
    %v454 = vmul.f32 %v449, %v453
    %v455 = vadd.f32 %v454, 0.05243302
    %v456 = vmul.f32 %v449, %v455
    %v457 = vadd.f32 %v456, 0.18741608
    %v458 = vmul.f32 %v449, %v457
    %v459 = vadd.f32 %v458, 1.1283791
    %v460 = vmul.f32 %v366, %v459
    %v461 = vmul.f32 %v449, 3.8918573e-05
    %v462 = vadd.f32 %v461, 0.001143296
    %v463 = vmul.f32 %v449, %v462
    %v464 = vadd.f32 %v463, 0.014752088
    %v465 = vmul.f32 %v449, %v464
    %v466 = vadd.f32 %v465, 0.112945676
    %v467 = vmul.f32 %v449, %v466
    %v468 = vadd.f32 %v467, 0.4994258
    %v469 = vmul.f32 %v449, %v468
    %v470 = vadd.f32 %v469, 1.0
    %v471 = vrcp.pop %v470
    %v472 = vmul.f32 %v470, %v471
    %v473 = vsub.f32 1.0, %v472
    %v474 = vmul.f32 %v471, %v473
    %v475 = vadd.f32 %v471, %v474
    %vm476 = vweird.f32 %v470
    %vm477 = vweird.f32 %v471
    %vm478 = vmor %vm476, %vm477
    %v479 = vsel %vm478, %v471, %v475
    %v480 = vand.u32 2147483647, %v470
    %vm481 = vcmp.eq.f32.partialorder %v480, 8.507059e+37
    %v482 = vand.u32 %v470, 2147483648
    %v483 = vor.u32 1.1754944e-38, %v482
    %v484 = vsel %vm481, %v483, %v479
    %v485 = vmul.f32 %v460, %v484
    %v486 = vmin.f32 %v485, 1.0
    %v487 = vmax.f32 %v486, -1.0
    %v488 = vmul.f32 %v367, %v367
    %v489 = vmin.f32 16.0, %v488
    %v490 = vmul.f32 %v489, 2.1237322e-06
    %v491 = vadd.f32 %v490, 0.00028619796
    %v492 = vmul.f32 %v489, %v491
    %v493 = vadd.f32 %v492, 0.0036580483
    %v494 = vmul.f32 %v489, %v493
    %v495 = vadd.f32 %v494, 0.05243302
    %v496 = vmul.f32 %v489, %v495
    %v497 = vadd.f32 %v496, 0.18741608
    %v498 = vmul.f32 %v489, %v497
    %v499 = vadd.f32 %v498, 1.1283791
    %v500 = vmul.f32 %v367, %v499
    %v501 = vmul.f32 %v489, 3.8918573e-05
    %v502 = vadd.f32 %v501, 0.001143296
    %v503 = vmul.f32 %v489, %v502
    %v504 = vadd.f32 %v503, 0.014752088
    %v505 = vmul.f32 %v489, %v504
    %v506 = vadd.f32 %v505, 0.112945676
    %v507 = vmul.f32 %v489, %v506
    %v508 = vadd.f32 %v507, 0.4994258
    %v509 = vmul.f32 %v489, %v508
    %v510 = vadd.f32 %v509, 1.0
    %v511 = vrcp.pop %v510
    %v512 = vmul.f32 %v510, %v511
    %v513 = vsub.f32 1.0, %v512
    %v514 = vmul.f32 %v511, %v513
    %v515 = vadd.f32 %v511, %v514
    %vm516 = vweird.f32 %v510
    %vm517 = vweird.f32 %v511
    %vm518 = vmor %vm516, %vm517
    %v519 = vsel %vm518, %v511, %v515
    %v520 = vand.u32 2147483647, %v510
    %vm521 = vcmp.eq.f32.partialorder %v520, 8.507059e+37
    %v522 = vand.u32 %v510, 2147483648
    %v523 = vor.u32 1.1754944e-38, %v522
    %v524 = vsel %vm521, %v523, %v519
    %v525 = vmul.f32 %v500, %v524
    %v526 = vmin.f32 %v525, 1.0
    %v527 = vmax.f32 %v526, -1.0
    %v528 = vadd.f32 %v407, 1.0
    %v529 = vadd.f32 %v447, 1.0
    %v530 = vadd.f32 %v487, 1.0
    %v531 = vadd.f32 %v527, 1.0
    %v532 = vmul.f32 %v360, %v528
    %v533 = vmul.f32 %v361, %v529
    %v534 = vmul.f32 %v362, %v530
    %v535 = vmul.f32 %v363, %v531
    %v536 = vpack.c.bf16 %v532, %v532
    %v537 = vpack.c.bf16 %v533, %v533
    %v538 = vpack.c.bf16 %v534, %v534
    %v539 = vpack.c.bf16 %v535, %v535
    %v540 = vld [vmem:[#allocation5] sm:$0xf]
    %v541 = vld [vmem:[#allocation5 + $0x4] sm:$0xf]
    %v542 = vld [vmem:[#allocation5 + $0x8] sm:$0xf]
    %v543 = vld [vmem:[#allocation5 + $0xc] sm:$0xf]
    %v544 = vld [vmem:[#allocation5 + $0x10] sm:$0xf]
    %v545 = vld [vmem:[#allocation5 + $0x14] sm:$0xf]
    %v546 = vld [vmem:[#allocation5 + $0x18] sm:$0xf]
    %v547 = vld [vmem:[#allocation5 + $0x1c] sm:$0xf]
    %v548 = vld [vmem:[#allocation5 + $0x20] sm:$0xf]
    %v549 = vld [vmem:[#allocation5 + $0x24] sm:$0xf]
    %v550 = vld [vmem:[#allocation5 + $0x28] sm:$0xf]
    %v551 = vld [vmem:[#allocation5 + $0x2c] sm:$0xf]
    %v552 = vld [vmem:[#allocation5 + $0x30] sm:$0xf]
    %v553 = vld [vmem:[#allocation5 + $0x34] sm:$0xf]
    %v554 = vld [vmem:[#allocation5 + $0x38] sm:$0xf]
    %v555 = vld [vmem:[#allocation5 + $0x3c] sm:$0xf]
    %v556 = vld [vmem:[#allocation5 + $0x40] sm:$0xf]
    %v557 = vld [vmem:[#allocation5 + $0x44] sm:$0xf]
    %v558 = vld [vmem:[#allocation5 + $0x48] sm:$0xf]
    %v559 = vld [vmem:[#allocation5 + $0x4c] sm:$0xf]
    %v560 = vld [vmem:[#allocation5 + $0x50] sm:$0xf]
    %v561 = vld [vmem:[#allocation5 + $0x54] sm:$0xf]
    %v562 = vld [vmem:[#allocation5 + $0x58] sm:$0xf]
    %v563 = vld [vmem:[#allocation5 + $0x5c] sm:$0xf]
    %v564 = vld [vmem:[#allocation5 + $0x60] sm:$0xf]
    %v565 = vld [vmem:[#allocation5 + $0x64] sm:$0xf]
    %v566 = vld [vmem:[#allocation5 + $0x68] sm:$0xf]
    %v567 = vld [vmem:[#allocation5 + $0x6c] sm:$0xf]
    %v568 = vld [vmem:[#allocation5 + $0x70] sm:$0xf]
    %v569 = vld [vmem:[#allocation5 + $0x74] sm:$0xf]
    %v570 = vld [vmem:[#allocation5 + $0x78] sm:$0xf]
    %v571 = vld [vmem:[#allocation5 + $0x7c] sm:$0xf]
    %v572 = vld [vmem:[#allocation5 + $0x80] sm:$0xf]
    %v573 = vld [vmem:[#allocation5 + $0x84] sm:$0xf]
    %v574 = vld [vmem:[#allocation5 + $0x88] sm:$0xf]
    %v575 = vld [vmem:[#allocation5 + $0x8c] sm:$0xf]
    %v576 = vld [vmem:[#allocation5 + $0x90] sm:$0xf]
    %v577 = vld [vmem:[#allocation5 + $0x94] sm:$0xf]
    %v578 = vld [vmem:[#allocation5 + $0x98] sm:$0xf]
    %v579 = vld [vmem:[#allocation5 + $0x9c] sm:$0xf]
    %v580 = vld [vmem:[#allocation5 + $0xa0] sm:$0xf]
    %v581 = vld [vmem:[#allocation5 + $0xa4] sm:$0xf]
    %v582 = vld [vmem:[#allocation5 + $0xa8] sm:$0xf]
    %v583 = vld [vmem:[#allocation5 + $0xac] sm:$0xf]
    %v584 = vld [vmem:[#allocation5 + $0xb0] sm:$0xf]
    %v585 = vld [vmem:[#allocation5 + $0xb4] sm:$0xf]
    %v586 = vld [vmem:[#allocation5 + $0xb8] sm:$0xf]
    %v587 = vld [vmem:[#allocation5 + $0xbc] sm:$0xf]
    %v588 = vld [vmem:[#allocation5 + $0xc0] sm:$0xf]
    %v589 = vld [vmem:[#allocation5 + $0xc4] sm:$0xf]
    %v590 = vld [vmem:[#allocation5 + $0xc8] sm:$0xf]
    %v591 = vld [vmem:[#allocation5 + $0xcc] sm:$0xf]
    %v592 = vld [vmem:[#allocation5 + $0xd0] sm:$0xf]
    %v593 = vld [vmem:[#allocation5 + $0xd4] sm:$0xf]
    %v594 = vld [vmem:[#allocation5 + $0xd8] sm:$0xf]
    %v595 = vld [vmem:[#allocation5 + $0xdc] sm:$0xf]
    %v596 = vld [vmem:[#allocation5 + $0xe0] sm:$0xf]
    %v597 = vld [vmem:[#allocation5 + $0xe4] sm:$0xf]
    %v598 = vld [vmem:[#allocation5 + $0xe8] sm:$0xf]
    %v599 = vld [vmem:[#allocation5 + $0xec] sm:$0xf]
    %v600 = vld [vmem:[#allocation5 + $0xf0] sm:$0xf]
    %v601 = vld [vmem:[#allocation5 + $0xf4] sm:$0xf]
    %v602 = vld [vmem:[#allocation5 + $0xf8] sm:$0xf]
    %v603 = vld [vmem:[#allocation5 + $0xfc] sm:$0xf]
    %v604 = vld [vmem:[%s6] sm:$0x1]
    %v606 = vperm.slane %v604, 0
    %v672 = vunpack.c.l.b16 %v540
    %v673 = vunpack.c.l.b16 %v541
    %v674 = vunpack.c.l.b16 %v542
    %v675 = vunpack.c.l.b16 %v543
    %v676 = vunpack.c.l.b16 %v544
    %v677 = vunpack.c.l.b16 %v545
    %v678 = vunpack.c.l.b16 %v546
    %v679 = vunpack.c.l.b16 %v547
    %v680 = vunpack.c.l.b16 %v548
    %v681 = vunpack.c.l.b16 %v549
    %v682 = vunpack.c.l.b16 %v550
    %v683 = vunpack.c.l.b16 %v551
    %v684 = vunpack.c.l.b16 %v552
    %v685 = vunpack.c.l.b16 %v553
    %v686 = vunpack.c.l.b16 %v554
    %v687 = vunpack.c.l.b16 %v555
    %v688 = vunpack.c.l.b16 %v556
    %v689 = vunpack.c.l.b16 %v557
    %v690 = vunpack.c.l.b16 %v558
    %v691 = vunpack.c.l.b16 %v559
    %v692 = vunpack.c.l.b16 %v560
    %v693 = vunpack.c.l.b16 %v561
    %v694 = vunpack.c.l.b16 %v562
    %v695 = vunpack.c.l.b16 %v563
    %v696 = vunpack.c.l.b16 %v564
    %v697 = vunpack.c.l.b16 %v565
    %v698 = vunpack.c.l.b16 %v566
    %v699 = vunpack.c.l.b16 %v567
    %v700 = vunpack.c.l.b16 %v568
    %v701 = vunpack.c.l.b16 %v569
    %v702 = vunpack.c.l.b16 %v570
    %v703 = vunpack.c.l.b16 %v571
    %v704 = vunpack.c.l.b16 %v572
    %v705 = vunpack.c.l.b16 %v573
    %v706 = vunpack.c.l.b16 %v574
    %v707 = vunpack.c.l.b16 %v575
    %v708 = vunpack.c.l.b16 %v576
    %v709 = vunpack.c.l.b16 %v577
    %v710 = vunpack.c.l.b16 %v578
    %v711 = vunpack.c.l.b16 %v579
    %v712 = vunpack.c.l.b16 %v580
    %v713 = vunpack.c.l.b16 %v581
    %v714 = vunpack.c.l.b16 %v582
    %v715 = vunpack.c.l.b16 %v583
    %v716 = vunpack.c.l.b16 %v584
    %v717 = vunpack.c.l.b16 %v585
    %v718 = vunpack.c.l.b16 %v586
    %v719 = vunpack.c.l.b16 %v587
    %v720 = vunpack.c.l.b16 %v588
    %v721 = vunpack.c.l.b16 %v589
    %v722 = vunpack.c.l.b16 %v590
    %v723 = vunpack.c.l.b16 %v591
    %v724 = vunpack.c.l.b16 %v592
    %v725 = vunpack.c.l.b16 %v593
    %v726 = vunpack.c.l.b16 %v594
    %v727 = vunpack.c.l.b16 %v595
    %v728 = vunpack.c.l.b16 %v596
    %v729 = vunpack.c.l.b16 %v597
    %v730 = vunpack.c.l.b16 %v598
    %v731 = vunpack.c.l.b16 %v599
    %v732 = vunpack.c.l.b16 %v600
    %v733 = vunpack.c.l.b16 %v601
    %v734 = vunpack.c.l.b16 %v602
    %v735 = vunpack.c.l.b16 %v603
    %v736 = vpack.c.b16 %v673, %v672
    %v737 = vpack.c.b16 %v675, %v674
    %v738 = vpack.c.b16 %v677, %v676
    %v739 = vpack.c.b16 %v679, %v678
    %v740 = vpack.c.b16 %v681, %v680
    %v741 = vpack.c.b16 %v683, %v682
    %v742 = vpack.c.b16 %v685, %v684
    %v743 = vpack.c.b16 %v687, %v686
    %v744 = vpack.c.b16 %v689, %v688
    %v745 = vpack.c.b16 %v691, %v690
    %v746 = vpack.c.b16 %v693, %v692
    %v747 = vpack.c.b16 %v695, %v694
    %v748 = vpack.c.b16 %v697, %v696
    %v749 = vpack.c.b16 %v699, %v698
    %v750 = vpack.c.b16 %v701, %v700
    %v751 = vpack.c.b16 %v703, %v702
    %v752 = vpack.c.b16 %v705, %v704
    %v753 = vpack.c.b16 %v707, %v706
    %v754 = vpack.c.b16 %v709, %v708
    %v755 = vpack.c.b16 %v711, %v710
    %v756 = vpack.c.b16 %v713, %v712
    %v757 = vpack.c.b16 %v715, %v714
    %v758 = vpack.c.b16 %v717, %v716
    %v759 = vpack.c.b16 %v719, %v718
    %v760 = vpack.c.b16 %v721, %v720
    %v761 = vpack.c.b16 %v723, %v722
    %v762 = vpack.c.b16 %v725, %v724
    %v763 = vpack.c.b16 %v727, %v726
    %v764 = vpack.c.b16 %v729, %v728
    %v765 = vpack.c.b16 %v731, %v730
    %v766 = vpack.c.b16 %v733, %v732
    %v767 = vpack.c.b16 %v735, %v734
    %800 = vmatpush.bf16.msra.mxu0 %v743
    %801 = vmatpush.bf16.msra.mxu0 %v742
    %802 = vmatpush.bf16.msra.mxu0 %v741
    %803 = vmatpush.bf16.msra.mxu0 %v740
    %804 = vmatpush.bf16.msra.mxu0 %v739
    %805 = vmatpush.bf16.msra.mxu0 %v738
    %806 = vmatpush.bf16.msra.mxu0 %v737
    %807 = vmatpush.bf16.msra.mxu0 %v736
    %808 = vmatmul.bf16.gmra.mxu0 %v536
    %v809 = vpop.f32.mrf.mxu0
    %v810 = vadd.f32 %v606, %v809
    %v811 = vpop.f32.mrf.mxu0
    %812 = vdwg.mxu0
    %813 = vmatpush.bf16.msra.mxu0 %v751
    %814 = vmatpush.bf16.msra.mxu0 %v750
    %815 = vmatpush.bf16.msra.mxu0 %v749
    %816 = vmatpush.bf16.msra.mxu0 %v748
    %817 = vmatpush.bf16.msra.mxu0 %v747
    %818 = vmatpush.bf16.msra.mxu0 %v746
    %819 = vmatpush.bf16.msra.mxu0 %v745
    %820 = vmatpush.bf16.msra.mxu0 %v744
    %821 = vmatmul.bf16.gmra.mxu0 %v537
    %v822 = vpop.f32.mrf.mxu0
    %v823 = vadd.f32 %v810, %v822
    %v824 = vpop.f32.mrf.mxu0
    %825 = vdwg.mxu0
    %826 = vmatpush.bf16.msra.mxu0 %v759
    %827 = vmatpush.bf16.msra.mxu0 %v758
    %828 = vmatpush.bf16.msra.mxu0 %v757
    %829 = vmatpush.bf16.msra.mxu0 %v756
    %830 = vmatpush.bf16.msra.mxu0 %v755
    %831 = vmatpush.bf16.msra.mxu0 %v754
    %832 = vmatpush.bf16.msra.mxu0 %v753
    %833 = vmatpush.bf16.msra.mxu0 %v752
    %834 = vmatmul.bf16.gmra.mxu0 %v538
    %v835 = vpop.f32.mrf.mxu0
    %v836 = vadd.f32 %v823, %v835
    %v837 = vpop.f32.mrf.mxu0
    %838 = vdwg.mxu0
    %839 = vmatpush.bf16.msra.mxu0 %v767
    %840 = vmatpush.bf16.msra.mxu0 %v766
    %841 = vmatpush.bf16.msra.mxu0 %v765
    %842 = vmatpush.bf16.msra.mxu0 %v764
    %843 = vmatpush.bf16.msra.mxu0 %v763
    %844 = vmatpush.bf16.msra.mxu0 %v762
    %845 = vmatpush.bf16.msra.mxu0 %v761
    %846 = vmatpush.bf16.msra.mxu0 %v760
    %847 = vmatmul.bf16.gmra.mxu0 %v539
    %v848 = vpop.f32.mrf.mxu0
    %v849 = vadd.f32 %v836, %v848
    %v850 = vpop.f32.mrf.mxu0
    %851 = vdwg.mxu0
    %v852 = vadd.f32 %v102, %v849
    %v853 = vpack.c.bf16 %v852, %v852
    %s854 = scalar_lea.vmem [#allocation2], 256
    %v855 = vld [vmem:[%s854] sm:$0xff]
    %v856 = vld [vmem:[%s854 + $0x8] sm:$0xff]
    %v857 = vld [vmem:[%s854 + $0x10] sm:$0xff]
    %v858 = vld [vmem:[%s854 + $0x18] sm:$0xff]
    %v859 = vld [vmem:[%s854 + $0x20] sm:$0xff]
    %v860 = vld [vmem:[%s854 + $0x28] sm:$0xff]
    %v861 = vld [vmem:[%s854 + $0x30] sm:$0xff]
    %v862 = vld [vmem:[%s854 + $0x38] sm:$0xff]
    %v863 = vld [vmem:[%s854 + $0x40] sm:$0xff]
    %v864 = vld [vmem:[%s854 + $0x48] sm:$0xff]
    %v865 = vld [vmem:[%s854 + $0x50] sm:$0xff]
    %v866 = vld [vmem:[%s854 + $0x58] sm:$0xff]
    %v867 = vld [vmem:[%s854 + $0x60] sm:$0xff]
    %v868 = vld [vmem:[%s854 + $0x68] sm:$0xff]
    %v869 = vld [vmem:[%s854 + $0x70] sm:$0xff]
    %v870 = vld [vmem:[%s854 + $0x78] sm:$0xff]
    %v871 = vld [vmem:[%s854 + $0x80] sm:$0xff]
    %v872 = vld [vmem:[%s854 + $0x88] sm:$0xff]
    %v873 = vld [vmem:[%s854 + $0x90] sm:$0xff]
    %v874 = vld [vmem:[%s854 + $0x98] sm:$0xff]
    %v875 = vld [vmem:[%s854 + $0xa0] sm:$0xff]
    %v876 = vld [vmem:[%s854 + $0xa8] sm:$0xff]
    %v877 = vld [vmem:[%s854 + $0xb0] sm:$0xff]
    %v878 = vld [vmem:[%s854 + $0xb8] sm:$0xff]
    %v879 = vld [vmem:[%s854 + $0xc0] sm:$0xff]
    %v880 = vld [vmem:[%s854 + $0xc8] sm:$0xff]
    %v881 = vld [vmem:[%s854 + $0xd0] sm:$0xff]
    %v882 = vld [vmem:[%s854 + $0xd8] sm:$0xff]
    %v883 = vld [vmem:[%s854 + $0xe0] sm:$0xff]
    %v884 = vld [vmem:[%s854 + $0xe8] sm:$0xff]
    %v885 = vld [vmem:[%s854 + $0xf0] sm:$0xff]
    %v886 = vld [vmem:[%s854 + $0xf8] sm:$0xff]
    %s887 = scalar_lea.vmem %s4, 4
    %v888 = vld [vmem:[%s887] sm:$0xf]
    %v890 = vperm.slane %v888, 0
    %v891 = vperm.slane %v888, 1
    %v892 = vperm.slane %v888, 2
    %v893 = vperm.slane %v888, 3
    %v930 = vunpack.c.l.b16 %v855
    %v931 = vunpack.c.h.b16 %v855
    %v932 = vunpack.c.l.b16 %v856
    %v933 = vunpack.c.h.b16 %v856
    %v934 = vunpack.c.l.b16 %v857
    %v935 = vunpack.c.h.b16 %v857
    %v936 = vunpack.c.l.b16 %v858
    %v937 = vunpack.c.h.b16 %v858
    %v938 = vunpack.c.l.b16 %v859
    %v939 = vunpack.c.h.b16 %v859
    %v940 = vunpack.c.l.b16 %v860
    %v941 = vunpack.c.h.b16 %v860
    %v942 = vunpack.c.l.b16 %v861
    %v943 = vunpack.c.h.b16 %v861
    %v944 = vunpack.c.l.b16 %v862
    %v945 = vunpack.c.h.b16 %v862
    %v946 = vunpack.c.l.b16 %v863
    %v947 = vunpack.c.h.b16 %v863
    %v948 = vunpack.c.l.b16 %v864
    %v949 = vunpack.c.h.b16 %v864
    %v950 = vunpack.c.l.b16 %v865
    %v951 = vunpack.c.h.b16 %v865
    %v952 = vunpack.c.l.b16 %v866
    %v953 = vunpack.c.h.b16 %v866
    %v954 = vunpack.c.l.b16 %v867
    %v955 = vunpack.c.h.b16 %v867
    %v956 = vunpack.c.l.b16 %v868
    %v957 = vunpack.c.h.b16 %v868
    %v958 = vunpack.c.l.b16 %v869
    %v959 = vunpack.c.h.b16 %v869
    %v960 = vunpack.c.l.b16 %v870
    %v961 = vunpack.c.h.b16 %v870
    %v962 = vunpack.c.l.b16 %v871
    %v963 = vunpack.c.h.b16 %v871
    %v964 = vunpack.c.l.b16 %v872
    %v965 = vunpack.c.h.b16 %v872
    %v966 = vunpack.c.l.b16 %v873
    %v967 = vunpack.c.h.b16 %v873
    %v968 = vunpack.c.l.b16 %v874
    %v969 = vunpack.c.h.b16 %v874
    %v970 = vunpack.c.l.b16 %v875
    %v971 = vunpack.c.h.b16 %v875
    %v972 = vunpack.c.l.b16 %v876
    %v973 = vunpack.c.h.b16 %v876
    %v974 = vunpack.c.l.b16 %v877
    %v975 = vunpack.c.h.b16 %v877
    %v976 = vunpack.c.l.b16 %v878
    %v977 = vunpack.c.h.b16 %v878
    %v978 = vunpack.c.l.b16 %v879
    %v979 = vunpack.c.h.b16 %v879
    %v980 = vunpack.c.l.b16 %v880
    %v981 = vunpack.c.h.b16 %v880
    %v982 = vunpack.c.l.b16 %v881
    %v983 = vunpack.c.h.b16 %v881
    %v984 = vunpack.c.l.b16 %v882
    %v985 = vunpack.c.h.b16 %v882
    %v986 = vunpack.c.l.b16 %v883
    %v987 = vunpack.c.h.b16 %v883
    %v988 = vunpack.c.l.b16 %v884
    %v989 = vunpack.c.h.b16 %v884
    %v990 = vunpack.c.l.b16 %v885
    %v991 = vunpack.c.h.b16 %v885
    %v992 = vunpack.c.l.b16 %v886
    %v993 = vunpack.c.h.b16 %v886
    %v994 = vpack.c.b16 %v934, %v930
    %v995 = vpack.c.b16 %v935, %v931
    %v996 = vpack.c.b16 %v936, %v932
    %v997 = vpack.c.b16 %v937, %v933
    %v998 = vpack.c.b16 %v942, %v938
    %v999 = vpack.c.b16 %v943, %v939
    %v1000 = vpack.c.b16 %v944, %v940
    %v1001 = vpack.c.b16 %v945, %v941
    %v1002 = vpack.c.b16 %v950, %v946
    %v1003 = vpack.c.b16 %v951, %v947
    %v1004 = vpack.c.b16 %v952, %v948
    %v1005 = vpack.c.b16 %v953, %v949
    %v1006 = vpack.c.b16 %v958, %v954
    %v1007 = vpack.c.b16 %v959, %v955
    %v1008 = vpack.c.b16 %v960, %v956
    %v1009 = vpack.c.b16 %v961, %v957
    %v1010 = vpack.c.b16 %v966, %v962
    %v1011 = vpack.c.b16 %v967, %v963
    %v1012 = vpack.c.b16 %v968, %v964
    %v1013 = vpack.c.b16 %v969, %v965
    %v1014 = vpack.c.b16 %v974, %v970
    %v1015 = vpack.c.b16 %v975, %v971
    %v1016 = vpack.c.b16 %v976, %v972
    %v1017 = vpack.c.b16 %v977, %v973
    %v1018 = vpack.c.b16 %v982, %v978
    %v1019 = vpack.c.b16 %v983, %v979
    %v1020 = vpack.c.b16 %v984, %v980
    %v1021 = vpack.c.b16 %v985, %v981
    %v1022 = vpack.c.b16 %v990, %v986
    %v1023 = vpack.c.b16 %v991, %v987
    %v1024 = vpack.c.b16 %v992, %v988
    %v1025 = vpack.c.b16 %v993, %v989
    %1058 = vmatpush.bf16.msra.mxu0 %v1022
    %1059 = vmatpush.bf16.msra.mxu0 %v1018
    %1060 = vmatpush.bf16.msra.mxu0 %v1014
    %1061 = vmatpush.bf16.msra.mxu0 %v1010
    %1062 = vmatpush.bf16.msra.mxu0 %v1006
    %1063 = vmatpush.bf16.msra.mxu0 %v1002
    %1064 = vmatpush.bf16.msra.mxu0 %v998
    %1065 = vmatpush.bf16.msra.mxu0 %v994
    %1066 = vmatmul.bf16.gmra.mxu0 %v853
    %v1067 = vpop.f32.mrf.mxu0
    %v1068 = vadd.f32 %v890, %v1067
    %v1069 = vpop.f32.mrf.mxu0
    %1070 = vdwg.mxu0
    %1071 = vmatpush.bf16.msra.mxu0 %v1023
    %1072 = vmatpush.bf16.msra.mxu0 %v1019
    %1073 = vmatpush.bf16.msra.mxu0 %v1015
    %1074 = vmatpush.bf16.msra.mxu0 %v1011
    %1075 = vmatpush.bf16.msra.mxu0 %v1007
    %1076 = vmatpush.bf16.msra.mxu0 %v1003
    %1077 = vmatpush.bf16.msra.mxu0 %v999
    %1078 = vmatpush.bf16.msra.mxu0 %v995
    %1079 = vmatmul.bf16.gmra.mxu0 %v853
    %v1080 = vpop.f32.mrf.mxu0
    %v1081 = vadd.f32 %v891, %v1080
    %v1082 = vpop.f32.mrf.mxu0
    %1083 = vdwg.mxu0
    %1084 = vmatpush.bf16.msra.mxu0 %v1024
    %1085 = vmatpush.bf16.msra.mxu0 %v1020
    %1086 = vmatpush.bf16.msra.mxu0 %v1016
    %1087 = vmatpush.bf16.msra.mxu0 %v1012
    %1088 = vmatpush.bf16.msra.mxu0 %v1008
    %1089 = vmatpush.bf16.msra.mxu0 %v1004
    %1090 = vmatpush.bf16.msra.mxu0 %v1000
    %1091 = vmatpush.bf16.msra.mxu0 %v996
    %1092 = vmatmul.bf16.gmra.mxu0 %v853
    %v1093 = vpop.f32.mrf.mxu0
    %v1094 = vadd.f32 %v892, %v1093
    %v1095 = vpop.f32.mrf.mxu0
    %1096 = vdwg.mxu0
    %1097 = vmatpush.bf16.msra.mxu0 %v1025
    %1098 = vmatpush.bf16.msra.mxu0 %v1021
    %1099 = vmatpush.bf16.msra.mxu0 %v1017
    %1100 = vmatpush.bf16.msra.mxu0 %v1013
    %1101 = vmatpush.bf16.msra.mxu0 %v1009
    %1102 = vmatpush.bf16.msra.mxu0 %v1005
    %1103 = vmatpush.bf16.msra.mxu0 %v1001
    %1104 = vmatpush.bf16.msra.mxu0 %v997
    %1105 = vmatmul.bf16.gmra.mxu0 %v853
    %v1106 = vpop.f32.mrf.mxu0
    %v1107 = vadd.f32 %v893, %v1106
    %v1108 = vpop.f32.mrf.mxu0
    %1109 = vdwg.mxu0
    %v1110 = vmul.f32 %v1068, 0.5
    %v1111 = vmul.f32 %v1081, 0.5
    %v1112 = vmul.f32 %v1094, 0.5
    %v1113 = vmul.f32 %v1107, 0.5
    %v1114 = vmul.f32 %v1068, 0.70710677
    %v1115 = vmul.f32 %v1081, 0.70710677
    %v1116 = vmul.f32 %v1094, 0.70710677
    %v1117 = vmul.f32 %v1107, 0.70710677
    %v1118 = vmul.f32 %v1114, %v1114
    %v1119 = vmin.f32 16.0, %v1118
    %v1120 = vmul.f32 %v1119, 2.1237322e-06
    %v1121 = vadd.f32 %v1120, 0.00028619796
    %v1122 = vmul.f32 %v1119, %v1121
    %v1123 = vadd.f32 %v1122, 0.0036580483
    %v1124 = vmul.f32 %v1119, %v1123
    %v1125 = vadd.f32 %v1124, 0.05243302
    %v1126 = vmul.f32 %v1119, %v1125
    %v1127 = vadd.f32 %v1126, 0.18741608
    %v1128 = vmul.f32 %v1119, %v1127
    %v1129 = vadd.f32 %v1128, 1.1283791
    %v1130 = vmul.f32 %v1114, %v1129
    %v1131 = vmul.f32 %v1119, 3.8918573e-05
    %v1132 = vadd.f32 %v1131, 0.001143296
    %v1133 = vmul.f32 %v1119, %v1132
    %v1134 = vadd.f32 %v1133, 0.014752088
    %v1135 = vmul.f32 %v1119, %v1134
    %v1136 = vadd.f32 %v1135, 0.112945676
    %v1137 = vmul.f32 %v1119, %v1136
    %v1138 = vadd.f32 %v1137, 0.4994258
    %v1139 = vmul.f32 %v1119, %v1138
    %v1140 = vadd.f32 %v1139, 1.0
    %v1141 = vrcp.pop %v1140
    %v1142 = vmul.f32 %v1140, %v1141
    %v1143 = vsub.f32 1.0, %v1142
    %v1144 = vmul.f32 %v1141, %v1143
    %v1145 = vadd.f32 %v1141, %v1144
    %vm1146 = vweird.f32 %v1140
    %vm1147 = vweird.f32 %v1141
    %vm1148 = vmor %vm1146, %vm1147
    %v1149 = vsel %vm1148, %v1141, %v1145
    %v1150 = vand.u32 2147483647, %v1140
    %vm1151 = vcmp.eq.f32.partialorder %v1150, 8.507059e+37
    %v1152 = vand.u32 %v1140, 2147483648
    %v1153 = vor.u32 1.1754944e-38, %v1152
    %v1154 = vsel %vm1151, %v1153, %v1149
    %v1155 = vmul.f32 %v1130, %v1154
    %v1156 = vmin.f32 %v1155, 1.0
    %v1157 = vmax.f32 %v1156, -1.0
    %v1158 = vmul.f32 %v1115, %v1115
    %v1159 = vmin.f32 16.0, %v1158
    %v1160 = vmul.f32 %v1159, 2.1237322e-06
    %v1161 = vadd.f32 %v1160, 0.00028619796
    %v1162 = vmul.f32 %v1159, %v1161
    %v1163 = vadd.f32 %v1162, 0.0036580483
    %v1164 = vmul.f32 %v1159, %v1163
    %v1165 = vadd.f32 %v1164, 0.05243302
    %v1166 = vmul.f32 %v1159, %v1165
    %v1167 = vadd.f32 %v1166, 0.18741608
    %v1168 = vmul.f32 %v1159, %v1167
    %v1169 = vadd.f32 %v1168, 1.1283791
    %v1170 = vmul.f32 %v1115, %v1169
    %v1171 = vmul.f32 %v1159, 3.8918573e-05
    %v1172 = vadd.f32 %v1171, 0.001143296
    %v1173 = vmul.f32 %v1159, %v1172
    %v1174 = vadd.f32 %v1173, 0.014752088
    %v1175 = vmul.f32 %v1159, %v1174
    %v1176 = vadd.f32 %v1175, 0.112945676
    %v1177 = vmul.f32 %v1159, %v1176
    %v1178 = vadd.f32 %v1177, 0.4994258
    %v1179 = vmul.f32 %v1159, %v1178
    %v1180 = vadd.f32 %v1179, 1.0
    %v1181 = vrcp.pop %v1180
    %v1182 = vmul.f32 %v1180, %v1181
    %v1183 = vsub.f32 1.0, %v1182
    %v1184 = vmul.f32 %v1181, %v1183
    %v1185 = vadd.f32 %v1181, %v1184
    %vm1186 = vweird.f32 %v1180
    %vm1187 = vweird.f32 %v1181
    %vm1188 = vmor %vm1186, %vm1187
    %v1189 = vsel %vm1188, %v1181, %v1185
    %v1190 = vand.u32 2147483647, %v1180
    %vm1191 = vcmp.eq.f32.partialorder %v1190, 8.507059e+37
    %v1192 = vand.u32 %v1180, 2147483648
    %v1193 = vor.u32 1.1754944e-38, %v1192
    %v1194 = vsel %vm1191, %v1193, %v1189
    %v1195 = vmul.f32 %v1170, %v1194
    %v1196 = vmin.f32 %v1195, 1.0
    %v1197 = vmax.f32 %v1196, -1.0
    %v1198 = vmul.f32 %v1116, %v1116
    %v1199 = vmin.f32 16.0, %v1198
    %v1200 = vmul.f32 %v1199, 2.1237322e-06
    %v1201 = vadd.f32 %v1200, 0.00028619796
    %v1202 = vmul.f32 %v1199, %v1201
    %v1203 = vadd.f32 %v1202, 0.0036580483
    %v1204 = vmul.f32 %v1199, %v1203
    %v1205 = vadd.f32 %v1204, 0.05243302
    %v1206 = vmul.f32 %v1199, %v1205
    %v1207 = vadd.f32 %v1206, 0.18741608
    %v1208 = vmul.f32 %v1199, %v1207
    %v1209 = vadd.f32 %v1208, 1.1283791
    %v1210 = vmul.f32 %v1116, %v1209
    %v1211 = vmul.f32 %v1199, 3.8918573e-05
    %v1212 = vadd.f32 %v1211, 0.001143296
    %v1213 = vmul.f32 %v1199, %v1212
    %v1214 = vadd.f32 %v1213, 0.014752088
    %v1215 = vmul.f32 %v1199, %v1214
    %v1216 = vadd.f32 %v1215, 0.112945676
    %v1217 = vmul.f32 %v1199, %v1216
    %v1218 = vadd.f32 %v1217, 0.4994258
    %v1219 = vmul.f32 %v1199, %v1218
    %v1220 = vadd.f32 %v1219, 1.0
    %v1221 = vrcp.pop %v1220
    %v1222 = vmul.f32 %v1220, %v1221
    %v1223 = vsub.f32 1.0, %v1222
    %v1224 = vmul.f32 %v1221, %v1223
    %v1225 = vadd.f32 %v1221, %v1224
    %vm1226 = vweird.f32 %v1220
    %vm1227 = vweird.f32 %v1221
    %vm1228 = vmor %vm1226, %vm1227
    %v1229 = vsel %vm1228, %v1221, %v1225
    %v1230 = vand.u32 2147483647, %v1220
    %vm1231 = vcmp.eq.f32.partialorder %v1230, 8.507059e+37
    %v1232 = vand.u32 %v1220, 2147483648
    %v1233 = vor.u32 1.1754944e-38, %v1232
    %v1234 = vsel %vm1231, %v1233, %v1229
    %v1235 = vmul.f32 %v1210, %v1234
    %v1236 = vmin.f32 %v1235, 1.0
    %v1237 = vmax.f32 %v1236, -1.0
    %v1238 = vmul.f32 %v1117, %v1117
    %v1239 = vmin.f32 16.0, %v1238
    %v1240 = vmul.f32 %v1239, 2.1237322e-06
    %v1241 = vadd.f32 %v1240, 0.00028619796
    %v1242 = vmul.f32 %v1239, %v1241
    %v1243 = vadd.f32 %v1242, 0.0036580483
    %v1244 = vmul.f32 %v1239, %v1243
    %v1245 = vadd.f32 %v1244, 0.05243302
    %v1246 = vmul.f32 %v1239, %v1245
    %v1247 = vadd.f32 %v1246, 0.18741608
    %v1248 = vmul.f32 %v1239, %v1247
    %v1249 = vadd.f32 %v1248, 1.1283791
    %v1250 = vmul.f32 %v1117, %v1249
    %v1251 = vmul.f32 %v1239, 3.8918573e-05
    %v1252 = vadd.f32 %v1251, 0.001143296
    %v1253 = vmul.f32 %v1239, %v1252
    %v1254 = vadd.f32 %v1253, 0.014752088
    %v1255 = vmul.f32 %v1239, %v1254
    %v1256 = vadd.f32 %v1255, 0.112945676
    %v1257 = vmul.f32 %v1239, %v1256
    %v1258 = vadd.f32 %v1257, 0.4994258
    %v1259 = vmul.f32 %v1239, %v1258
    %v1260 = vadd.f32 %v1259, 1.0
    %v1261 = vrcp.pop %v1260
    %v1262 = vmul.f32 %v1260, %v1261
    %v1263 = vsub.f32 1.0, %v1262
    %v1264 = vmul.f32 %v1261, %v1263
    %v1265 = vadd.f32 %v1261, %v1264
    %vm1266 = vweird.f32 %v1260
    %vm1267 = vweird.f32 %v1261
    %vm1268 = vmor %vm1266, %vm1267
    %v1269 = vsel %vm1268, %v1261, %v1265
    %v1270 = vand.u32 2147483647, %v1260
    %vm1271 = vcmp.eq.f32.partialorder %v1270, 8.507059e+37
    %v1272 = vand.u32 %v1260, 2147483648
    %v1273 = vor.u32 1.1754944e-38, %v1272
    %v1274 = vsel %vm1271, %v1273, %v1269
    %v1275 = vmul.f32 %v1250, %v1274
    %v1276 = vmin.f32 %v1275, 1.0
    %v1277 = vmax.f32 %v1276, -1.0
    %v1278 = vadd.f32 %v1157, 1.0
    %v1279 = vadd.f32 %v1197, 1.0
    %v1280 = vadd.f32 %v1237, 1.0
    %v1281 = vadd.f32 %v1277, 1.0
    %v1282 = vmul.f32 %v1110, %v1278
    %v1283 = vmul.f32 %v1111, %v1279
    %v1284 = vmul.f32 %v1112, %v1280
    %v1285 = vmul.f32 %v1113, %v1281
    %v1286 = vpack.c.bf16 %v1282, %v1282
    %v1287 = vpack.c.bf16 %v1283, %v1283
    %v1288 = vpack.c.bf16 %v1284, %v1284
    %v1289 = vpack.c.bf16 %v1285, %v1285
    %s1290 = scalar_lea.vmem [#allocation5], 256
    %v1291 = vld [vmem:[%s1290] sm:$0xf]
    %v1292 = vld [vmem:[%s1290 + $0x4] sm:$0xf]
    %v1293 = vld [vmem:[%s1290 + $0x8] sm:$0xf]
    %v1294 = vld [vmem:[%s1290 + $0xc] sm:$0xf]
    %v1295 = vld [vmem:[%s1290 + $0x10] sm:$0xf]
    %v1296 = vld [vmem:[%s1290 + $0x14] sm:$0xf]
    %v1297 = vld [vmem:[%s1290 + $0x18] sm:$0xf]
    %v1298 = vld [vmem:[%s1290 + $0x1c] sm:$0xf]
    %v1299 = vld [vmem:[%s1290 + $0x20] sm:$0xf]
    %v1300 = vld [vmem:[%s1290 + $0x24] sm:$0xf]
    %v1301 = vld [vmem:[%s1290 + $0x28] sm:$0xf]
    %v1302 = vld [vmem:[%s1290 + $0x2c] sm:$0xf]
    %v1303 = vld [vmem:[%s1290 + $0x30] sm:$0xf]
    %v1304 = vld [vmem:[%s1290 + $0x34] sm:$0xf]
    %v1305 = vld [vmem:[%s1290 + $0x38] sm:$0xf]
    %v1306 = vld [vmem:[%s1290 + $0x3c] sm:$0xf]
    %v1307 = vld [vmem:[%s1290 + $0x40] sm:$0xf]
    %v1308 = vld [vmem:[%s1290 + $0x44] sm:$0xf]
    %v1309 = vld [vmem:[%s1290 + $0x48] sm:$0xf]
    %v1310 = vld [vmem:[%s1290 + $0x4c] sm:$0xf]
    %v1311 = vld [vmem:[%s1290 + $0x50] sm:$0xf]
    %v1312 = vld [vmem:[%s1290 + $0x54] sm:$0xf]
    %v1313 = vld [vmem:[%s1290 + $0x58] sm:$0xf]
    %v1314 = vld [vmem:[%s1290 + $0x5c] sm:$0xf]
    %v1315 = vld [vmem:[%s1290 + $0x60] sm:$0xf]
    %v1316 = vld [vmem:[%s1290 + $0x64] sm:$0xf]
    %v1317 = vld [vmem:[%s1290 + $0x68] sm:$0xf]
    %v1318 = vld [vmem:[%s1290 + $0x6c] sm:$0xf]
    %v1319 = vld [vmem:[%s1290 + $0x70] sm:$0xf]
    %v1320 = vld [vmem:[%s1290 + $0x74] sm:$0xf]
    %v1321 = vld [vmem:[%s1290 + $0x78] sm:$0xf]
    %v1322 = vld [vmem:[%s1290 + $0x7c] sm:$0xf]
    %v1323 = vld [vmem:[%s1290 + $0x80] sm:$0xf]
    %v1324 = vld [vmem:[%s1290 + $0x84] sm:$0xf]
    %v1325 = vld [vmem:[%s1290 + $0x88] sm:$0xf]
    %v1326 = vld [vmem:[%s1290 + $0x8c] sm:$0xf]
    %v1327 = vld [vmem:[%s1290 + $0x90] sm:$0xf]
    %v1328 = vld [vmem:[%s1290 + $0x94] sm:$0xf]
    %v1329 = vld [vmem:[%s1290 + $0x98] sm:$0xf]
    %v1330 = vld [vmem:[%s1290 + $0x9c] sm:$0xf]
    %v1331 = vld [vmem:[%s1290 + $0xa0] sm:$0xf]
    %v1332 = vld [vmem:[%s1290 + $0xa4] sm:$0xf]
    %v1333 = vld [vmem:[%s1290 + $0xa8] sm:$0xf]
    %v1334 = vld [vmem:[%s1290 + $0xac] sm:$0xf]
    %v1335 = vld [vmem:[%s1290 + $0xb0] sm:$0xf]
    %v1336 = vld [vmem:[%s1290 + $0xb4] sm:$0xf]
    %v1337 = vld [vmem:[%s1290 + $0xb8] sm:$0xf]
    %v1338 = vld [vmem:[%s1290 + $0xbc] sm:$0xf]
    %v1339 = vld [vmem:[%s1290 + $0xc0] sm:$0xf]
    %v1340 = vld [vmem:[%s1290 + $0xc4] sm:$0xf]
    %v1341 = vld [vmem:[%s1290 + $0xc8] sm:$0xf]
    %v1342 = vld [vmem:[%s1290 + $0xcc] sm:$0xf]
    %v1343 = vld [vmem:[%s1290 + $0xd0] sm:$0xf]
    %v1344 = vld [vmem:[%s1290 + $0xd4] sm:$0xf]
    %v1345 = vld [vmem:[%s1290 + $0xd8] sm:$0xf]
    %v1346 = vld [vmem:[%s1290 + $0xdc] sm:$0xf]
    %v1347 = vld [vmem:[%s1290 + $0xe0] sm:$0xf]
    %v1348 = vld [vmem:[%s1290 + $0xe4] sm:$0xf]
    %v1349 = vld [vmem:[%s1290 + $0xe8] sm:$0xf]
    %v1350 = vld [vmem:[%s1290 + $0xec] sm:$0xf]
    %v1351 = vld [vmem:[%s1290 + $0xf0] sm:$0xf]
    %v1352 = vld [vmem:[%s1290 + $0xf4] sm:$0xf]
    %v1353 = vld [vmem:[%s1290 + $0xf8] sm:$0xf]
    %v1354 = vld [vmem:[%s1290 + $0xfc] sm:$0xf]
    %s1355 = scalar_lea.vmem %s6, 1
    %v1356 = vld [vmem:[%s1355] sm:$0x1]
    %v1358 = vperm.slane %v1356, 0
    %v1424 = vunpack.c.l.b16 %v1291
    %v1425 = vunpack.c.l.b16 %v1292
    %v1426 = vunpack.c.l.b16 %v1293
    %v1427 = vunpack.c.l.b16 %v1294
    %v1428 = vunpack.c.l.b16 %v1295
    %v1429 = vunpack.c.l.b16 %v1296
    %v1430 = vunpack.c.l.b16 %v1297
    %v1431 = vunpack.c.l.b16 %v1298
    %v1432 = vunpack.c.l.b16 %v1299
    %v1433 = vunpack.c.l.b16 %v1300
    %v1434 = vunpack.c.l.b16 %v1301
    %v1435 = vunpack.c.l.b16 %v1302
    %v1436 = vunpack.c.l.b16 %v1303
    %v1437 = vunpack.c.l.b16 %v1304
    %v1438 = vunpack.c.l.b16 %v1305
    %v1439 = vunpack.c.l.b16 %v1306
    %v1440 = vunpack.c.l.b16 %v1307
    %v1441 = vunpack.c.l.b16 %v1308
    %v1442 = vunpack.c.l.b16 %v1309
    %v1443 = vunpack.c.l.b16 %v1310
    %v1444 = vunpack.c.l.b16 %v1311
    %v1445 = vunpack.c.l.b16 %v1312
    %v1446 = vunpack.c.l.b16 %v1313
    %v1447 = vunpack.c.l.b16 %v1314
    %v1448 = vunpack.c.l.b16 %v1315
    %v1449 = vunpack.c.l.b16 %v1316
    %v1450 = vunpack.c.l.b16 %v1317
    %v1451 = vunpack.c.l.b16 %v1318
    %v1452 = vunpack.c.l.b16 %v1319
    %v1453 = vunpack.c.l.b16 %v1320
    %v1454 = vunpack.c.l.b16 %v1321
    %v1455 = vunpack.c.l.b16 %v1322
    %v1456 = vunpack.c.l.b16 %v1323
    %v1457 = vunpack.c.l.b16 %v1324
    %v1458 = vunpack.c.l.b16 %v1325
    %v1459 = vunpack.c.l.b16 %v1326
    %v1460 = vunpack.c.l.b16 %v1327
    %v1461 = vunpack.c.l.b16 %v1328
    %v1462 = vunpack.c.l.b16 %v1329
    %v1463 = vunpack.c.l.b16 %v1330
    %v1464 = vunpack.c.l.b16 %v1331
    %v1465 = vunpack.c.l.b16 %v1332
    %v1466 = vunpack.c.l.b16 %v1333
    %v1467 = vunpack.c.l.b16 %v1334
    %v1468 = vunpack.c.l.b16 %v1335
    %v1469 = vunpack.c.l.b16 %v1336
    %v1470 = vunpack.c.l.b16 %v1337
    %v1471 = vunpack.c.l.b16 %v1338
    %v1472 = vunpack.c.l.b16 %v1339
    %v1473 = vunpack.c.l.b16 %v1340
    %v1474 = vunpack.c.l.b16 %v1341
    %v1475 = vunpack.c.l.b16 %v1342
    %v1476 = vunpack.c.l.b16 %v1343
    %v1477 = vunpack.c.l.b16 %v1344
    %v1478 = vunpack.c.l.b16 %v1345
    %v1479 = vunpack.c.l.b16 %v1346
    %v1480 = vunpack.c.l.b16 %v1347
    %v1481 = vunpack.c.l.b16 %v1348
    %v1482 = vunpack.c.l.b16 %v1349
    %v1483 = vunpack.c.l.b16 %v1350
    %v1484 = vunpack.c.l.b16 %v1351
    %v1485 = vunpack.c.l.b16 %v1352
    %v1486 = vunpack.c.l.b16 %v1353
    %v1487 = vunpack.c.l.b16 %v1354
    %v1488 = vpack.c.b16 %v1425, %v1424
    %v1489 = vpack.c.b16 %v1427, %v1426
    %v1490 = vpack.c.b16 %v1429, %v1428
    %v1491 = vpack.c.b16 %v1431, %v1430
    %v1492 = vpack.c.b16 %v1433, %v1432
    %v1493 = vpack.c.b16 %v1435, %v1434
    %v1494 = vpack.c.b16 %v1437, %v1436
    %v1495 = vpack.c.b16 %v1439, %v1438
    %v1496 = vpack.c.b16 %v1441, %v1440
    %v1497 = vpack.c.b16 %v1443, %v1442
    %v1498 = vpack.c.b16 %v1445, %v1444
    %v1499 = vpack.c.b16 %v1447, %v1446
    %v1500 = vpack.c.b16 %v1449, %v1448
    %v1501 = vpack.c.b16 %v1451, %v1450
    %v1502 = vpack.c.b16 %v1453, %v1452
    %v1503 = vpack.c.b16 %v1455, %v1454
    %v1504 = vpack.c.b16 %v1457, %v1456
    %v1505 = vpack.c.b16 %v1459, %v1458
    %v1506 = vpack.c.b16 %v1461, %v1460
    %v1507 = vpack.c.b16 %v1463, %v1462
    %v1508 = vpack.c.b16 %v1465, %v1464
    %v1509 = vpack.c.b16 %v1467, %v1466
    %v1510 = vpack.c.b16 %v1469, %v1468
    %v1511 = vpack.c.b16 %v1471, %v1470
    %v1512 = vpack.c.b16 %v1473, %v1472
    %v1513 = vpack.c.b16 %v1475, %v1474
    %v1514 = vpack.c.b16 %v1477, %v1476
    %v1515 = vpack.c.b16 %v1479, %v1478
    %v1516 = vpack.c.b16 %v1481, %v1480
    %v1517 = vpack.c.b16 %v1483, %v1482
    %v1518 = vpack.c.b16 %v1485, %v1484
    %v1519 = vpack.c.b16 %v1487, %v1486
    %1552 = vmatpush.bf16.msra.mxu0 %v1495
    %1553 = vmatpush.bf16.msra.mxu0 %v1494
    %1554 = vmatpush.bf16.msra.mxu0 %v1493
    %1555 = vmatpush.bf16.msra.mxu0 %v1492
    %1556 = vmatpush.bf16.msra.mxu0 %v1491
    %1557 = vmatpush.bf16.msra.mxu0 %v1490
    %1558 = vmatpush.bf16.msra.mxu0 %v1489
    %1559 = vmatpush.bf16.msra.mxu0 %v1488
    %1560 = vmatmul.bf16.gmra.mxu0 %v1286
    %v1561 = vpop.f32.mrf.mxu0
    %v1562 = vadd.f32 %v1358, %v1561
    %v1563 = vpop.f32.mrf.mxu0
    %1564 = vdwg.mxu0
    %1565 = vmatpush.bf16.msra.mxu0 %v1503
    %1566 = vmatpush.bf16.msra.mxu0 %v1502
    %1567 = vmatpush.bf16.msra.mxu0 %v1501
    %1568 = vmatpush.bf16.msra.mxu0 %v1500
    %1569 = vmatpush.bf16.msra.mxu0 %v1499
    %1570 = vmatpush.bf16.msra.mxu0 %v1498
    %1571 = vmatpush.bf16.msra.mxu0 %v1497
    %1572 = vmatpush.bf16.msra.mxu0 %v1496
    %1573 = vmatmul.bf16.gmra.mxu0 %v1287
    %v1574 = vpop.f32.mrf.mxu0
    %v1575 = vadd.f32 %v1562, %v1574
    %v1576 = vpop.f32.mrf.mxu0
    %1577 = vdwg.mxu0
    %1578 = vmatpush.bf16.msra.mxu0 %v1511
    %1579 = vmatpush.bf16.msra.mxu0 %v1510
    %1580 = vmatpush.bf16.msra.mxu0 %v1509
    %1581 = vmatpush.bf16.msra.mxu0 %v1508
    %1582 = vmatpush.bf16.msra.mxu0 %v1507
    %1583 = vmatpush.bf16.msra.mxu0 %v1506
    %1584 = vmatpush.bf16.msra.mxu0 %v1505
    %1585 = vmatpush.bf16.msra.mxu0 %v1504
    %1586 = vmatmul.bf16.gmra.mxu0 %v1288
    %v1587 = vpop.f32.mrf.mxu0
    %v1588 = vadd.f32 %v1575, %v1587
    %v1589 = vpop.f32.mrf.mxu0
    %1590 = vdwg.mxu0
    %1591 = vmatpush.bf16.msra.mxu0 %v1519
    %1592 = vmatpush.bf16.msra.mxu0 %v1518
    %1593 = vmatpush.bf16.msra.mxu0 %v1517
    %1594 = vmatpush.bf16.msra.mxu0 %v1516
    %1595 = vmatpush.bf16.msra.mxu0 %v1515
    %1596 = vmatpush.bf16.msra.mxu0 %v1514
    %1597 = vmatpush.bf16.msra.mxu0 %v1513
    %1598 = vmatpush.bf16.msra.mxu0 %v1512
    %1599 = vmatmul.bf16.gmra.mxu0 %v1289
    %v1600 = vpop.f32.mrf.mxu0
    %v1601 = vadd.f32 %v1588, %v1600
    %v1602 = vpop.f32.mrf.mxu0
    %1603 = vdwg.mxu0
    %v1604 = vadd.f32 %v852, %v1601
    %v1605 = vpack.c.bf16 %v1604, %v1604
    %v1606 = vld [vmem:[%s7] sm:$0xf]
    %v1607 = vld [vmem:[%s7 + $0x4] sm:$0xf]
    %v1608 = vld [vmem:[%s7 + $0x8] sm:$0xf]
    %v1609 = vld [vmem:[%s7 + $0xc] sm:$0xf]
    %v1610 = vld [vmem:[%s7 + $0x10] sm:$0xf]
    %v1611 = vld [vmem:[%s7 + $0x14] sm:$0xf]
    %v1612 = vld [vmem:[%s7 + $0x18] sm:$0xf]
    %v1613 = vld [vmem:[%s7 + $0x1c] sm:$0xf]
    %v1614 = vld [vmem:[%s7 + $0x20] sm:$0xf]
    %v1615 = vld [vmem:[%s7 + $0x24] sm:$0xf]
    %v1616 = vld [vmem:[%s7 + $0x28] sm:$0xf]
    %v1617 = vld [vmem:[%s7 + $0x2c] sm:$0xf]
    %v1618 = vld [vmem:[%s7 + $0x30] sm:$0xf]
    %v1619 = vld [vmem:[%s7 + $0x34] sm:$0xf]
    %v1620 = vld [vmem:[%s7 + $0x38] sm:$0xf]
    %v1621 = vld [vmem:[%s7 + $0x3c] sm:$0xf]
    %v1622 = vld [vmem:[%s8] sm:$0x1]
    %v1624 = vperm.slane %v1622, 0
    %v1642 = vunpack.c.l.b16 %v1606
    %v1643 = vunpack.c.l.b16 %v1607
    %v1644 = vunpack.c.l.b16 %v1608
    %v1645 = vunpack.c.l.b16 %v1609
    %v1646 = vunpack.c.l.b16 %v1610
    %v1647 = vunpack.c.l.b16 %v1611
    %v1648 = vunpack.c.l.b16 %v1612
    %v1649 = vunpack.c.l.b16 %v1613
    %v1650 = vunpack.c.l.b16 %v1614
    %v1651 = vunpack.c.l.b16 %v1615
    %v1652 = vunpack.c.l.b16 %v1616
    %v1653 = vunpack.c.l.b16 %v1617
    %v1654 = vunpack.c.l.b16 %v1618
    %v1655 = vunpack.c.l.b16 %v1619
    %v1656 = vunpack.c.l.b16 %v1620
    %v1657 = vunpack.c.l.b16 %v1621
    %v1658 = vpack.c.b16 %v1643, %v1642
    %v1659 = vpack.c.b16 %v1645, %v1644
    %v1660 = vpack.c.b16 %v1647, %v1646
    %v1661 = vpack.c.b16 %v1649, %v1648
    %v1662 = vpack.c.b16 %v1651, %v1650
    %v1663 = vpack.c.b16 %v1653, %v1652
    %v1664 = vpack.c.b16 %v1655, %v1654
    %v1665 = vpack.c.b16 %v1657, %v1656
    %1674 = vmatpush.bf16.msra.mxu0 %v1665
    %1675 = vmatpush.bf16.msra.mxu0 %v1664
    %1676 = vmatpush.bf16.msra.mxu0 %v1663
    %1677 = vmatpush.bf16.msra.mxu0 %v1662
    %1678 = vmatpush.bf16.msra.mxu0 %v1661
    %1679 = vmatpush.bf16.msra.mxu0 %v1660
    %1680 = vmatpush.bf16.msra.mxu0 %v1659
    %1681 = vmatpush.bf16.msra.mxu0 %v1658
    %1682 = vmatmul.bf16.gmra.mxu0 %v1605
    %v1683 = vpop.f32.mrf.mxu0
    %v1684 = vadd.f32 %v1624, %v1683
    %v1685 = vpop.f32.mrf.mxu0
    %1686 = vdwg.mxu0
    %1687 = vst [vmem:[#allocation7] sm:$0xff] %v1684
    // Predicated region
    $region46: #{simba_forward.1} parent=1 // pred_check
      _
    $region47: #{simba_forward.1} parent=1 // pred_check_branch
      %1689 = sbr.rel (0) target = $region49
    $region48: #{simba_forward.1} parent=1 // pred_region
      %1691 = vsyncadd [#allocation4], 0
      %s1693 = sshll.u32 [#allocation7], 4
      %s1694 = int_to_ptr.vmem [resolvable:$true] %s1693
      %s1695 = sshll.u32 %s9, 4
      %s1696 = int_to_ptr.hbm [resolvable:$true] %s1695
      %1698 = dma.vmem_to_hbm [thread:$0]  %s1694, 128, %s1696, [#allocation4]
    $region49: #{simba_forward.1} parent=1 // pred_fallthru
      _
    // Predicated region
    $region50: #{simba_forward.1} parent=1 // pred_check
      _
    $region51: #{simba_forward.1} parent=1 // pred_check_branch
      %1700 = sbr.rel (0) target = $region53
    $region52: #{simba_forward.1} parent=1 // pred_region
      %1702 = dma.done [#allocation4], 128
    $region53: #{simba_forward.1} parent=1 // pred_fallthru
      _
    %1703 = vsyncpa [#allocation3], 1
    %1704 = vsyncpa [#allocation6], 1
    %1705 = vsyncpa [#allocation4], 1

</llo_original>
